<compile_context>
chip_gen: v7x
topology: tpu7x:2x2x1
jax: 0.10.0
libtpu: 0.0.40
codegen_flags: <defaults>
</compile_context>

<pallas_src>
import functools
import math

import jax
import jax.numpy as jnp
from jax.experimental import pallas as pl
from jax.experimental.pallas import tpu as pltpu

_LANE = 128


def _round_up(a, b):
    return -(-a // b) * b


def _vmem_bytes(shape, dtype):
    """Approximate VMEM footprint: last dim padded to 128 lanes, second-minor
    padded to the dtype's sublane multiple (8 for f32, 16 for bf16)."""
    it = jnp.dtype(dtype).itemsize
    dims = [int(d) for d in shape]
    dims[-1] = _round_up(dims[-1], _LANE)
    if len(dims) >= 2:
        dims[-2] = _round_up(dims[-2], max(32 // it, 1))
    n = 1
    for d in dims:
        n *= max(d, 1)
    return n * it


@functools.lru_cache(maxsize=1)
def _tpu_budget():
    """(per-step working-set budget, vmem_limit_bytes, is_v5) for this chip."""
    cap = 64 * 1024 * 1024                       # conservative fallback (v7x)
    try:
        cap = int(pltpu.get_tpu_info().vmem_capacity_bytes)
    except Exception:
        pass
    is_v5 = False
    try:
        is_v5 = "v5" in jax.devices()[0].device_kind.lower()
    except Exception:
        pass
    budget = (cap * 3) // 8          # ~24 MiB on v7x, ~48 MiB on v5e/v6e
    limit = (cap * 3) // 4           # ~48 MiB on v7x, ~96 MiB on v5e/v6e
    return budget, limit, is_v5


def _conv_bn_silu_kernel(*refs, TH, W, KH, KW, C1, HB, has_halo, use_im2col):
    """One (c2-tile, batch, H-tile) grid step.

    refs (in order):
      x_main: (TH, Wp, C1)        non-overlapping H block of the padded input
      x_halo: (HB, Wp, C1)        next KH-1 rows of the same array  (KH > 1)
      w:      (KH*KW*C1, TC2)     conv weights, HWIO-flattened
      scale:  (1, TC2)  f32       gamma / sqrt(var + eps)
      bias:   (1, TC2)  f32       beta - mean * scale
      o:      (TH*W, TC2)         flat, lane-dense output slab
    scratch:
      win:    (TH+HB, Wp, C1)     assembled halo window           (KH > 1)
      col:    (TH*W, KH*KW*C1)    im2col scratch (small-C1 path only)
    """
    it = iter(refs)
    x_main = next(it)
    x_halo = next(it) if has_halo else None
    w_ref, scale_ref, bias_ref, o_ref = next(it), next(it), next(it), next(it)
    win_ref = next(it) if has_halo else None
    col_ref = next(it) if use_im2col else None

    if has_halo:
        win_ref[0:TH, :, :] = x_main[...]
        win_ref[TH:TH + HB, :, :] = x_halo[...]
        src = win_ref
    else:
        src = x_main

    if use_im2col:
        # Small-C1 stem path: build the patch matrix once, single MXU dot.
        # TODO(synk): C1 in {3,4} wastes lanes; such stem layers are better
        # served by XLA's conv -- kept here for completeness/correctness.
        for kh in range(KH):
            for kw in range(KW):
                t = kh * KW + kw
                col_ref[:, t * C1:(t + 1) * C1] = (
                    src[kh:kh + TH, kw:kw + W, :].reshape(TH * W, C1))
        acc = jnp.dot(col_ref[...], w_ref[...],
                      preferred_element_type=jnp.float32)
    else:
        # C1 >= 128 (or pointwise k=1): one full-K-depth MXU dot per tap,
        # accumulated in f32.  No scratch write/read round-trip.
        acc = None
        for kh in range(KH):
            for kw in range(KW):
                t = kh * KW + kw
                patch = src[kh:kh + TH, kw:kw + W, :].reshape(TH * W, C1)
                d = jnp.dot(patch, w_ref[t * C1:(t + 1) * C1, :],
                            preferred_element_type=jnp.float32)
                acc = d if acc is None else acc + d

    # f32 epilogue: BN (scale, bias), then SiLU.  exp + reciprocal ride the
    # EUP; one Newton step restores ~f32 accuracy of the approx reciprocal.
    y = acc * scale_ref[...] + bias_ref[...]
    den = 1.0 + jnp.exp(-y)
    r = pl.reciprocal(den, approx=True)
    r = r * (2.0 - den * r)
    y = y * r
    o_ref[...] = y.astype(o_ref.dtype)


def _step_vmem_bytes(TH, *, W, Wp, C1, KH, KW, TC2, cdt, out_dtype, use_im2col):
    """Per-grid-step VMEM working set (double-buffered where Pallas does)."""
    HB = 2 * (KH // 2)
    wk = KH * KW * C1
    b = 2 * _vmem_bytes((TH, Wp, C1), cdt)                  # main input
    if HB:
        b += 2 * _vmem_bytes((HB, Wp, C1), cdt)             # halo input
        b += _vmem_bytes((TH + HB, Wp, C1), cdt)            # window scratch
    b += 2 * _vmem_bytes((wk, TC2), cdt)                    # weights
    b += 4 * _vmem_bytes((1, TC2), jnp.float32)             # scale + bias
    b += 2 * _vmem_bytes((TH * W, TC2), out_dtype)          # output slab
    if use_im2col:
        b += _vmem_bytes((TH * W, wk), cdt)                 # im2col scratch
    b += 2 * _vmem_bytes((TH * W, TC2), jnp.float32)        # f32 acc/epilogue
    b += _vmem_bytes((TH * W, C1), cdt)                     # per-tap patch
    return b


def _pick_th(*, H, W, Wp, C1, KH, KW, TC2, cdt, out_dtype, use_im2col,
             budget, block_h, need_split):
    HB = 2 * (KH // 2)
    step = 8 if HB == 0 else (8 * HB) // math.gcd(8, HB)    # lcm(8, KH-1)
    th_full = _round_up(H, step)
    if block_h is not None:
        return min(_round_up(max(int(block_h), 1), step), th_full)
    th_cap = th_full
    if need_split and H > step:
        # Keep >= 2 H tiles so both v7x TensorCores have work.
        th_cap = min(th_cap, max(step, _round_up(-(-H // 2), step)))
    th = th_cap
    while th > step and _step_vmem_bytes(
            th, W=W, Wp=Wp, C1=C1, KH=KH, KW=KW, TC2=TC2, cdt=cdt,
            out_dtype=out_dtype, use_im2col=use_im2col) > budget:
        th -= step
    return th


@functools.partial(jax.jit, static_argnames=("eps", "block_h", "compute_dtype"))
def conv_bn_silu(x_nchw, w_oihw, gamma, beta, rmean, rvar, eps=1e-5,
                 block_h=None, compute_dtype=jnp.bfloat16):
    """Conv2d(odd k, s=1, 'same', g=1, d=1, bias=False) -> BatchNorm2d(eval) -> SiLU."""
    N, C1, H, W = x_nchw.shape
    C2, c1_w, KH, KW = w_oihw.shape
    # TODO(synk): grouped conv (g>1), stride>1, dilation>1 not implemented
    # (module defaults are g=s=d=1).
    assert c1_w == C1, "grouped conv (g>1) not supported"
    assert KH % 2 == 1 and KW % 2 == 1, \
        "even kernel sizes need asymmetric 'same' padding"
    ph, pw = KH // 2, KW // 2
    HB = 2 * ph
    cdt = jnp.dtype(compute_dtype)
    out_dtype = x_nchw.dtype

    # ---- BN folding: per-channel scale & bias applied in the f32 epilogue. ----
    inv_std = 1.0 / jnp.sqrt(rvar.astype(jnp.float32) + jnp.float32(eps))
    scale = gamma.astype(jnp.float32) * inv_std
    bias = beta.astype(jnp.float32) - rmean.astype(jnp.float32) * scale

    C2p = _round_up(C2, _LANE)
    wk = KH * KW * C1

    budget, vmem_limit, is_v5 = _tpu_budget()

    # ---- C2 tiling: keep the whole weight block resident when it fits. ----
    if 2 * _vmem_bytes((wk, C2p), cdt) <= budget // 3:
        TC2 = C2p                           # weights fetched once (c2 axis = 1)
    elif (not is_v5) and C2p % 256 == 0:
        TC2 = 256                           # full 256-wide MXU on v6e / v7x
    else:
        TC2 = 128
    nC2 = C2p // TC2

    use_im2col = (KH * KW > 1) and not (C1 >= 128 and C1 % 8 == 0)

    # ---- H tiling: halo windows read straight off one padded NHWC array. ----
    Wp = W + 2 * pw
    TH = _pick_th(H=H, W=W, Wp=Wp, C1=C1, KH=KH, KW=KW, TC2=TC2, cdt=cdt,
                  out_dtype=out_dtype, use_im2col=use_im2col, budget=budget,
                  block_h=block_h, need_split=(N * nC2 == 1))
    nHT = -(-H // TH)
    Hp = nHT * TH + HB
    THp = TH + HB

    # ---- Weights / per-channel epilogue params (lane-padded C2). ----
    w = jnp.transpose(w_oihw, (2, 3, 1, 0)).reshape(wk, C2)        # OIHW->HWIO
    w = jnp.pad(w, ((0, 0), (0, C2p - C2))).astype(cdt)
    scale_p = jnp.pad(scale, (0, C2p - C2)).reshape(1, C2p)
    bias_p = jnp.pad(bias, (0, C2p - C2)).reshape(1, C2p)

    # Single padded NHWC copy (fuses with the unavoidable NCHW->NHWC
    # transpose); the kernel reads overlapping halo windows from it directly.
    x = jnp.transpose(x_nchw, (0, 2, 3, 1)).astype(cdt)
    xp = jnp.pad(x, ((0, 0), (ph, Hp - H - ph), (pw, pw), (0, 0)))

    kernel = functools.partial(_conv_bn_silu_kernel, TH=TH, W=W, KH=KH, KW=KW,
                               C1=C1, HB=HB, has_halo=(HB > 0),
                               use_im2col=use_im2col)

    hbb = TH // HB if HB else 0    # halo block-index stride (TH % HB == 0)
    in_specs = [pl.BlockSpec((None, TH, Wp, C1),
                             lambda c2, n, ht: (n, ht, 0, 0))]
    operands = [xp]
    if HB:
        in_specs.append(pl.BlockSpec(
            (None, HB, Wp, C1),
            lambda c2, n, ht: (n, (ht + 1) * hbb, 0, 0)))
        operands.append(xp)        # same array, different (halo) window
    in_specs += [
        pl.BlockSpec((wk, TC2), lambda c2, n, ht: (0, c2)),
        pl.BlockSpec((1, TC2), lambda c2, n, ht: (0, c2)),
        pl.BlockSpec((1, TC2), lambda c2, n, ht: (0, c2)),
    ]
    operands += [w, scale_p, bias_p]

    scratch = []
    if HB:
        scratch.append(pltpu.VMEM((THp, Wp, C1), cdt))
    if use_im2col:
        scratch.append(pltpu.VMEM((TH * W, wk), cdt))

    out = pl.pallas_call(
        kernel,
        out_shape=jax.ShapeDtypeStruct((N, nHT, TH * W, C2p), out_dtype),
        grid_spec=pltpu.PrefetchScalarGridSpec(
            num_scalar_prefetch=0,
            grid=(nC2, N, nHT),        # c2 outermost -> weight block resident
            in_specs=in_specs,
            out_specs=pl.BlockSpec((None, None, TH * W, TC2),
                                   lambda c2, n, ht: (n, ht, 0, c2)),
            scratch_shapes=scratch,
        ),
        compiler_params=pltpu.CompilerParams(
            # No reduction axis -> all grid axes independent.
            dimension_semantics=("parallel", "parallel", "parallel"),
            vmem_limit_bytes=int(vmem_limit),
        ),
    )(*operands)

    # Un-flatten rows, drop H / C2 padding, back to NCHW.
    out = out.reshape(N, nHT * TH, W, C2p)[:, :H, :, :C2]
    return jnp.transpose(out, (0, 3, 1, 2))


def _reference(x_nchw, w_oihw, gamma, beta, rmean, rvar, eps=1e-5):
    """Pure-JAX reference of the PyTorch Conv module forward (BN eval mode)."""
    y = jax.lax.conv_general_dilated(
        x_nchw, w_oihw, window_strides=(1, 1), padding="SAME",
        dimension_numbers=("NCHW", "OIHW", "NCHW"))
    scale = (gamma / jnp.sqrt(rvar + eps)).reshape(1, -1, 1, 1)
    bias = (beta - rmean * gamma / jnp.sqrt(rvar + eps)).reshape(1, -1, 1, 1)
    y = y * scale + bias
    return y * jax.nn.sigmoid(y)


def _make_case(key, N, C1, H, W, C2, K):
    ks = jax.random.split(key, 6)
    wscale = 0.3 / math.sqrt(C1 * K * K)
    x = jax.random.normal(ks[0], (N, C1, H, W), jnp.float32)
    w = jax.random.normal(ks[1], (C2, C1, K, K), jnp.float32) * wscale
    gamma = 1.0 + 0.1 * jax.random.normal(ks[2], (C2,), jnp.float32)
    beta = 0.1 * jax.random.normal(ks[3], (C2,), jnp.float32)
    rmean = 0.1 * jax.random.normal(ks[4], (C2,), jnp.float32)
    rvar = jnp.abs(jax.random.normal(ks[5], (C2,), jnp.float32)) + 1.0
    return x, w, gamma, beta, rmean, rvar


if __name__ == "__main__":
    key = jax.random.PRNGKey(0)
    cases = [
        # (N, C1, H, W, C2, K, compute_dtype, block_h, tol)
        (2, 4, 16, 16, 8, 3, jnp.float32, 8, 1e-3),     # stem: im2col + halo, 2 H tiles
        (2, 4, 16, 16, 8, 3, None, None, 6e-2),         # default bf16 operands
        (1, 128, 16, 16, 32, 3, jnp.float32, None, 2e-3),  # per-tap MXU path (C1>=128)
        (1, 4, 16, 16, 8, 1, jnp.float32, None, 1e-3),  # pointwise k=1 path
    ]
    for i, (N, C1, H, W, C2, K, cdt, bh, tol) in enumerate(cases):
        key, sub = jax.random.split(key)
        x, w, gamma, beta, rmean, rvar = _make_case(sub, N, C1, H, W, C2, K)
        ref = _reference(x, w, gamma, beta, rmean, rvar)
        kwargs = {} if cdt is None else {"compute_dtype": cdt}
        out = conv_bn_silu(x, w, gamma, beta, rmean, rvar, block_h=bh, **kwargs)
        out = jax.block_until_ready(out)
        assert out.shape == (N, C2, H, W), (i, out.shape)
        err = float(jnp.max(jnp.abs(out.astype(jnp.float32) - ref)))
        assert err <= tol, f"case {i}: max abs err {err} > {tol}"
    print("KERNEL_OK")
</pallas_src>

<mosaic_0001>
module attributes {stable_mosaic.version = 11 : i64} {
  func.func @_conv_bn_silu_kernel(%arg0: i32, %arg1: i32, %arg2: i32, %arg3: memref<1x8x18x4xf32, #tpu.memory_space<vmem>>, %arg4: memref<1x2x18x4xf32, #tpu.memory_space<vmem>>, %arg5: memref<36x128xf32, #tpu.memory_space<vmem>>, %arg6: memref<1x128xf32, #tpu.memory_space<vmem>>, %arg7: memref<1x128xf32, #tpu.memory_space<vmem>>, %arg8: memref<1x1x128x128xf32, #tpu.memory_space<vmem>>, %arg9: memref<10x18x4xf32, #tpu.memory_space<vmem>>, %arg10: memref<128x36xf32, #tpu.memory_space<vmem>>) attributes {dimension_semantics = [#tpu.dimension_semantics<parallel>, #tpu.dimension_semantics<parallel>, #tpu.dimension_semantics<parallel>], iteration_bounds = array<i64: 1, 2, 2>, scalar_prefetch = 0 : i64, scratch_operands = 2 : i64, tpu.core_type = #tpu.core_type<tc>, window_params = [{transform_indices = @transform_0, window_bounds = array<i64: 1, 8, 18, 4>}, {transform_indices = @transform_1, window_bounds = array<i64: 1, 2, 18, 4>}, {transform_indices = @transform_2, window_bounds = array<i64: 36, 128>}, {transform_indices = @transform_3, window_bounds = array<i64: 1, 128>}, {transform_indices = @transform_4, window_bounds = array<i64: 1, 128>}, {transform_indices = @transform_5, window_bounds = array<i64: 1, 1, 128, 128>}]} {
    %c0 = arith.constant 0 : index
    %c0_0 = arith.constant 0 : index
    %c0_1 = arith.constant 0 : index
    %c0_2 = arith.constant 0 : index
    %0 = vector.load %arg3[%c0, %c0_0, %c0_1, %c0_2] : memref<1x8x18x4xf32, #tpu.memory_space<vmem>>, vector<1x8x18x4xf32>
    %1 = vector.shape_cast %0 : vector<1x8x18x4xf32> to vector<8x18x4xf32>
    %c0_3 = arith.constant 0 : index
    %c0_4 = arith.constant 0 : index
    %c0_5 = arith.constant 0 : index
    %2 = vector.load %arg9[%c0_3, %c0_4, %c0_5] : memref<10x18x4xf32, #tpu.memory_space<vmem>>, vector<8x18x4xf32>
    tpu.vector_store %arg9[%c0_3, %c0_4, %c0_5], %1 {strides = array<i32>} : memref<10x18x4xf32, #tpu.memory_space<vmem>>, vector<8x18x4xf32>,
    %c0_6 = arith.constant 0 : index
    %c0_7 = arith.constant 0 : index
    %c0_8 = arith.constant 0 : index
    %c0_9 = arith.constant 0 : index
    %3 = vector.load %arg4[%c0_6, %c0_7, %c0_8, %c0_9] : memref<1x2x18x4xf32, #tpu.memory_space<vmem>>, vector<1x2x18x4xf32>
    %4 = vector.shape_cast %3 : vector<1x2x18x4xf32> to vector<2x18x4xf32>
    %c8 = arith.constant 8 : index
    %c0_10 = arith.constant 0 : index
    %c0_11 = arith.constant 0 : index
    %5 = vector.load %arg9[%c8, %c0_10, %c0_11] : memref<10x18x4xf32, #tpu.memory_space<vmem>>, vector<2x18x4xf32>
    tpu.vector_store %arg9[%c8, %c0_10, %c0_11], %4 {strides = array<i32>} : memref<10x18x4xf32, #tpu.memory_space<vmem>>, vector<2x18x4xf32>,
    %c0_12 = arith.constant 0 : index
    %c0_13 = arith.constant 0 : index
    %c0_14 = arith.constant 0 : index
    %6 = vector.load %arg9[%c0_12, %c0_13, %c0_14] : memref<10x18x4xf32, #tpu.memory_space<vmem>>, vector<8x16x4xf32>
    %7 = vector.shape_cast %6 : vector<8x16x4xf32> to vector<128x4xf32>
    %c0_15 = arith.constant 0 : index
    %c0_16 = arith.constant 0 : index
    %8 = vector.load %arg10[%c0_15, %c0_16] : memref<128x36xf32, #tpu.memory_space<vmem>>, vector<128x4xf32>
    tpu.vector_store %arg10[%c0_15, %c0_16], %7 {strides = array<i32>} : memref<128x36xf32, #tpu.memory_space<vmem>>, vector<128x4xf32>,
    %c0_17 = arith.constant 0 : index
    %c1 = arith.constant 1 : index
    %c0_18 = arith.constant 0 : index
    %9 = vector.load %arg9[%c0_17, %c1, %c0_18] : memref<10x18x4xf32, #tpu.memory_space<vmem>>, vector<8x16x4xf32>
    %10 = vector.shape_cast %9 : vector<8x16x4xf32> to vector<128x4xf32>
    %c0_19 = arith.constant 0 : index
    %c4 = arith.constant 4 : index
    %11 = vector.load %arg10[%c0_19, %c4] : memref<128x36xf32, #tpu.memory_space<vmem>>, vector<128x4xf32>
    tpu.vector_store %arg10[%c0_19, %c4], %10 {strides = array<i32>} : memref<128x36xf32, #tpu.memory_space<vmem>>, vector<128x4xf32>,
    %c0_20 = arith.constant 0 : index
    %c2 = arith.constant 2 : index
    %c0_21 = arith.constant 0 : index
    %12 = vector.load %arg9[%c0_20, %c2, %c0_21] : memref<10x18x4xf32, #tpu.memory_space<vmem>>, vector<8x16x4xf32>
    %13 = vector.shape_cast %12 : vector<8x16x4xf32> to vector<128x4xf32>
    %c0_22 = arith.constant 0 : index
    %c8_23 = arith.constant 8 : index
    %14 = vector.load %arg10[%c0_22, %c8_23] : memref<128x36xf32, #tpu.memory_space<vmem>>, vector<128x4xf32>
    tpu.vector_store %arg10[%c0_22, %c8_23], %13 {strides = array<i32>} : memref<128x36xf32, #tpu.memory_space<vmem>>, vector<128x4xf32>,
    %c1_24 = arith.constant 1 : index
    %c0_25 = arith.constant 0 : index
    %c0_26 = arith.constant 0 : index
    %15 = vector.load %arg9[%c1_24, %c0_25, %c0_26] : memref<10x18x4xf32, #tpu.memory_space<vmem>>, vector<8x16x4xf32>
    %16 = vector.shape_cast %15 : vector<8x16x4xf32> to vector<128x4xf32>
    %c0_27 = arith.constant 0 : index
    %c12 = arith.constant 12 : index
    %17 = vector.load %arg10[%c0_27, %c12] : memref<128x36xf32, #tpu.memory_space<vmem>>, vector<128x4xf32>
    tpu.vector_store %arg10[%c0_27, %c12], %16 {strides = array<i32>} : memref<128x36xf32, #tpu.memory_space<vmem>>, vector<128x4xf32>,
    %c1_28 = arith.constant 1 : index
    %c1_29 = arith.constant 1 : index
    %c0_30 = arith.constant 0 : index
    %18 = vector.load %arg9[%c1_28, %c1_29, %c0_30] : memref<10x18x4xf32, #tpu.memory_space<vmem>>, vector<8x16x4xf32>
    %19 = vector.shape_cast %18 : vector<8x16x4xf32> to vector<128x4xf32>
    %c0_31 = arith.constant 0 : index
    %c16 = arith.constant 16 : index
    %20 = vector.load %arg10[%c0_31, %c16] : memref<128x36xf32, #tpu.memory_space<vmem>>, vector<128x4xf32>
    tpu.vector_store %arg10[%c0_31, %c16], %19 {strides = array<i32>} : memref<128x36xf32, #tpu.memory_space<vmem>>, vector<128x4xf32>,
    %c1_32 = arith.constant 1 : index
    %c2_33 = arith.constant 2 : index
    %c0_34 = arith.constant 0 : index
    %21 = vector.load %arg9[%c1_32, %c2_33, %c0_34] : memref<10x18x4xf32, #tpu.memory_space<vmem>>, vector<8x16x4xf32>
    %22 = vector.shape_cast %21 : vector<8x16x4xf32> to vector<128x4xf32>
    %c0_35 = arith.constant 0 : index
    %c20 = arith.constant 20 : index
    %23 = vector.load %arg10[%c0_35, %c20] : memref<128x36xf32, #tpu.memory_space<vmem>>, vector<128x4xf32>
    tpu.vector_store %arg10[%c0_35, %c20], %22 {strides = array<i32>} : memref<128x36xf32, #tpu.memory_space<vmem>>, vector<128x4xf32>,
    %c2_36 = arith.constant 2 : index
    %c0_37 = arith.constant 0 : index
    %c0_38 = arith.constant 0 : index
    %24 = vector.load %arg9[%c2_36, %c0_37, %c0_38] : memref<10x18x4xf32, #tpu.memory_space<vmem>>, vector<8x16x4xf32>
    %25 = vector.shape_cast %24 : vector<8x16x4xf32> to vector<128x4xf32>
    %c0_39 = arith.constant 0 : index
    %c24 = arith.constant 24 : index
    %26 = vector.load %arg10[%c0_39, %c24] : memref<128x36xf32, #tpu.memory_space<vmem>>, vector<128x4xf32>
    tpu.vector_store %arg10[%c0_39, %c24], %25 {strides = array<i32>} : memref<128x36xf32, #tpu.memory_space<vmem>>, vector<128x4xf32>,
    %c2_40 = arith.constant 2 : index
    %c1_41 = arith.constant 1 : index
    %c0_42 = arith.constant 0 : index
    %27 = vector.load %arg9[%c2_40, %c1_41, %c0_42] : memref<10x18x4xf32, #tpu.memory_space<vmem>>, vector<8x16x4xf32>
    %28 = vector.shape_cast %27 : vector<8x16x4xf32> to vector<128x4xf32>
    %c0_43 = arith.constant 0 : index
    %c28 = arith.constant 28 : index
    %29 = vector.load %arg10[%c0_43, %c28] : memref<128x36xf32, #tpu.memory_space<vmem>>, vector<128x4xf32>
    tpu.vector_store %arg10[%c0_43, %c28], %28 {strides = array<i32>} : memref<128x36xf32, #tpu.memory_space<vmem>>, vector<128x4xf32>,
    %c2_44 = arith.constant 2 : index
    %c2_45 = arith.constant 2 : index
    %c0_46 = arith.constant 0 : index
    %30 = vector.load %arg9[%c2_44, %c2_45, %c0_46] : memref<10x18x4xf32, #tpu.memory_space<vmem>>, vector<8x16x4xf32>
    %31 = vector.shape_cast %30 : vector<8x16x4xf32> to vector<128x4xf32>
    %c0_47 = arith.constant 0 : index
    %c32 = arith.constant 32 : index
    %32 = vector.load %arg10[%c0_47, %c32] : memref<128x36xf32, #tpu.memory_space<vmem>>, vector<128x4xf32>
    tpu.vector_store %arg10[%c0_47, %c32], %31 {strides = array<i32>} : memref<128x36xf32, #tpu.memory_space<vmem>>, vector<128x4xf32>,
    %c0_48 = arith.constant 0 : index
    %c0_49 = arith.constant 0 : index
    %33 = vector.load %arg10[%c0_48, %c0_49] : memref<128x36xf32, #tpu.memory_space<vmem>>, vector<128x36xf32>
    %c0_50 = arith.constant 0 : index
    %c0_51 = arith.constant 0 : index
    %34 = vector.load %arg5[%c0_50, %c0_51] : memref<36x128xf32, #tpu.memory_space<vmem>>, vector<36x128xf32>
    %cst = arith.constant dense<0.000000e+00> : vector<128x128xf32>
    %35 = tpu.matmul %33, %34, %cst {dimension_numbers = #tpu.dot_dimension_numbers<[1], [0], [0], [1], [0, 0, 1, 1], [], []>} : vector<128x36xf32>, vector<36x128xf32>, vector<128x128xf32> -> vector<128x128xf32>
    %c0_52 = arith.constant 0 : index
    %c0_53 = arith.constant 0 : index
    %36 = vector.load %arg6[%c0_52, %c0_53] : memref<1x128xf32, #tpu.memory_space<vmem>>, vector<1x128xf32>
    %37 = vector.broadcast %36 : vector<1x128xf32> to vector<128x128xf32>
    %38 = arith.mulf %35, %37 : vector<128x128xf32>
    %c0_54 = arith.constant 0 : index
    %c0_55 = arith.constant 0 : index
    %39 = vector.load %arg7[%c0_54, %c0_55] : memref<1x128xf32, #tpu.memory_space<vmem>>, vector<1x128xf32>
    %40 = vector.broadcast %39 : vector<1x128xf32> to vector<128x128xf32>
    %41 = arith.addf %38, %40 : vector<128x128xf32>
    %cst_56 = arith.constant 0.000000e+00 : f32
    %42 = vector.broadcast %cst_56 : f32 to vector<128x128xf32>
    %43 = arith.subf %42, %41 : vector<128x128xf32>
    %44 = math.exp %43 : vector<128x128xf32>
    %cst_57 = arith.constant 1.000000e+00 : f32
    %45 = vector.broadcast %cst_57 : f32 to vector<128x128xf32>
    %46 = arith.addf %45, %44 : vector<128x128xf32>
    %47 = tpu.reciprocal %46 {approx = true} : vector<128x128xf32> -> vector<128x128xf32>
    %48 = arith.mulf %46, %47 : vector<128x128xf32>
    %cst_58 = arith.constant 2.000000e+00 : f32
    %49 = vector.broadcast %cst_58 : f32 to vector<128x128xf32>
    %50 = arith.subf %49, %48 : vector<128x128xf32>
    %51 = arith.mulf %47, %50 : vector<128x128xf32>
    %52 = arith.mulf %41, %51 : vector<128x128xf32>
    %c0_59 = arith.constant 0 : index
    %c0_60 = arith.constant 0 : index
    %c0_61 = arith.constant 0 : index
    %c0_62 = arith.constant 0 : index
    %53 = vector.load %arg8[%c0_59, %c0_60, %c0_61, %c0_62] : memref<1x1x128x128xf32, #tpu.memory_space<vmem>>, vector<1x1x128x128xf32>
    %54 = vector.shape_cast %53 : vector<1x1x128x128xf32> to vector<128x128xf32>
    %55 = vector.shape_cast %52 : vector<128x128xf32> to vector<1x1x128x128xf32>
    tpu.vector_store %arg8[%c0_59, %c0_60, %c0_61, %c0_62], %55 {strides = array<i32>} : memref<1x1x128x128xf32, #tpu.memory_space<vmem>>, vector<1x1x128x128xf32>,
    return
  }
  func.func @transform_0(%arg0: i32, %arg1: i32, %arg2: i32) -> (i32, i32, i32, i32) {
    %c0_i32 = arith.constant 0 : i32
    %c0_i32_0 = arith.constant 0 : i32
    %c0_i32_1 = arith.constant 0 : i32
    return %arg1, %arg2, %c0_i32, %c0_i32_0 : i32, i32, i32, i32
  }
  func.func @transform_1(%arg0: i32, %arg1: i32, %arg2: i32) -> (i32, i32, i32, i32) {
    %c1_i32 = arith.constant 1 : i32
    %0 = arith.addi %arg2, %c1_i32 : i32
    %c4_i32 = arith.constant 4 : i32
    %1 = arith.muli %0, %c4_i32 : i32
    %c0_i32 = arith.constant 0 : i32
    %c0_i32_0 = arith.constant 0 : i32
    %c0_i32_1 = arith.constant 0 : i32
    return %arg1, %1, %c0_i32, %c0_i32_0 : i32, i32, i32, i32
  }
  func.func @transform_2(%arg0: i32, %arg1: i32, %arg2: i32) -> (i32, i32) {
    %c0_i32 = arith.constant 0 : i32
    %c0_i32_0 = arith.constant 0 : i32
    return %c0_i32, %arg0 : i32, i32
  }
  func.func @transform_3(%arg0: i32, %arg1: i32, %arg2: i32) -> (i32, i32) {
    %c0_i32 = arith.constant 0 : i32
    %c0_i32_0 = arith.constant 0 : i32
    return %c0_i32, %arg0 : i32, i32
  }
  func.func @transform_4(%arg0: i32, %arg1: i32, %arg2: i32) -> (i32, i32) {
    %c0_i32 = arith.constant 0 : i32
    %c0_i32_0 = arith.constant 0 : i32
    return %c0_i32, %arg0 : i32, i32
  }
  func.func @transform_5(%arg0: i32, %arg1: i32, %arg2: i32) -> (i32, i32, i32, i32) {
    %c0_i32 = arith.constant 0 : i32
    %c0_i32_0 = arith.constant 0 : i32
    return %arg1, %arg2, %c0_i32, %arg0 : i32, i32, i32, i32
  }
}

</mosaic_0001>

<llo_original>
// kernel: conv_bn_silu.1
$region0: #{conv_bn_silu.1}
  #allocation0 [shape = 'u32[]', space=smem, size = 0x4, offset = 0x4, fixed_abs, tag = 'smem constant byte address 0x4 - core index']
  #allocation1 [shape = 'u32[144,128]{1,0:T(1,128)}', space=vmem, size = 0x12000, scoped, tag = 'internal scratch']
  #allocation2 [shape = 'f32[10,18,4]{2,1,0:T(8,128)}', space=vmem, size = 0x1e000, scoped, tag = 'scratch operand']
  #allocation3 [shape = 'f32[128,36]{1,0:T(8,128)}', space=vmem, size = 0x10000, scoped, tag = 'scratch operand']
  %s0 = inlined_call_operand.vmem [shape: f32[2,18,18,4], index: 0, kind: input, shape index: {}, may-alias: {0,1}]
  %s1 = inlined_call_operand.vmem [shape: f32[2,18,18,4], index: 1, kind: input, shape index: {}, may-alias: {0,1}]
  %s2 = inlined_call_operand.vmem [shape: f32[36,128], index: 2, kind: input, shape index: {}]
  %s3 = inlined_call_operand.vmem [shape: f32[1,128], index: 3, kind: input, shape index: {}]
  %s4 = inlined_call_operand.vmem [shape: f32[1,128], index: 4, kind: input, shape index: {}]
  %s5 = inlined_call_operand.vmem [shape: f32[2,2,128,128], index: 5, kind: output, shape index: {}]
  %s6 = sld [smem:[#allocation0]]
  $region53: #{conv_bn_silu.1} parent=0
    _
  %s8 = ssub.s32 1, %s6
  %s9 = scalar_select 0, %s8, %s6
  loop: start=0, step=1, limit=6
  $region2: #{conv_bn_silu.1} parent=0 // loop_pre_header
    _
  $region3: #{conv_bn_silu.1} parent=0 // loop_header
    %s11 = sphi 0, %s15
    %p12 = scmp.ge.s32.totalorder %s11, 6
    %s18 = sphi 0, %s37
    %s19 = sphi 0, %s33
    %s20 = sphi 0, %s29
    %s21 = sphi 0, %s18
    %s22 = sphi 0, %s19
    %s23 = sphi 0, %s20
    %s24 = sphi 0, %s21
    %s25 = sphi 0, %s22
    %s26 = sphi 0, %s23
    %s42 = sphi 0, %s44
    %s45 = sphi 0, %s42
    %s46 = sphi 0, %s45
    %s62 = sphi 0, %s46
    %s74 = sphi 0, %s76
    %s77 = sphi 0, %s74
    %s78 = sphi 0, %s77
    %s94 = sphi 0, %s78
    %s100 = sphi 0, %s102
    %s103 = sphi 0, %s100
    %s104 = sphi 0, %s103
    %s120 = sphi 0, %s104
    %s126 = sphi 0, %s128
    %s129 = sphi 0, %s126
    %s130 = sphi 0, %s129
    %s146 = sphi 0, %s130
    %s152 = sphi 0, %s154
    %s155 = sphi 0, %s152
    %s156 = sphi 0, %s155
    %s172 = sphi 0, %s156
    %s182 = sphi 0, %s184
    %s185 = sphi 0, %s182
    %s186 = sphi 0, %s185
    %s202 = sphi 0, %s186
  $region4: #{conv_bn_silu.1} parent=0 // loop_header_branch
    %14 = sbr.rel (%p12) target = $region8
  $region5: #{conv_bn_silu.1} parent=0 // loop_body
    %s16 = ssub.s32 %s11, 1
    %s17 = ssub.s32 %s11, 2
    %s27 = sadd.s32 1, %s20
    %p28 = scmp.ge.s32.totalorder %s27, 2
    %s29 = scalar_select %p28, 0, %s27
    %s30 = sadd.s32 1, %s19
    %s31 = scalar_select %p28, %s30, %s19
    %p32 = scmp.ge.s32.totalorder %s31, 2
    %s33 = scalar_select %p32, 0, %s31
    %s34 = sadd.s32 1, %s18
    %s35 = scalar_select %p32, %s34, %s18
    %p36 = scmp.ge.s32.totalorder %s35, 1
    %s37 = scalar_select %p36, 0, %s35
    %s38 = ssub.s32 %s19, %s33
    %s39 = ssub.s32 %s20, %s29
    %s40 = sor.u32 %s38, %s39
    %p41 = scmp.eq.s32.totalorder %s40, 0
    %s43 = sadd.s32 %s42, 1
    %s44 = scalar_select %p41, %s42, %s43
    %p47 = pneg %p41
    %p48 = scmp.eq.s32.totalorder %s11, 3
    %p49 = por %p47, %p48
    %p50 = scmp.ne.s32.totalorder %s42, %s45
    %p51 = scmp.eq.s32.totalorder %s11, 0
    %p52 = por %p50, %p51
    %p53 = scmp.ne.s32.totalorder %s42, %s45
    %p54 = scmp.eq.s32.totalorder %s16, 3
    %p55 = por %p53, %p54
    %p56 = scmp.ne.s32.totalorder %s45, %s46
    %p57 = scmp.eq.s32.totalorder %s16, 0
    %p58 = por %p56, %p57
    %p59 = scmp.ne.s32.totalorder %s45, %s46
    %p60 = scmp.eq.s32.totalorder %s17, 3
    %p61 = por %p59, %p60
    %p63 = scmp.ne.s32.totalorder %s46, %s62
    %p64 = scmp.eq.s32.totalorder %s17, 0
    %p65 = por %p63, %p64
    %s66 = sadd.s32 %s20, 1
    %s67 = smul.u32 %s66, 4
    %s68 = sadd.s32 %s29, 1
    %s69 = smul.u32 %s68, 4
    %s70 = ssub.s32 %s19, %s33
    %s71 = ssub.s32 %s67, %s69
    %s72 = sor.u32 %s70, %s71
    %p73 = scmp.eq.s32.totalorder %s72, 0
    %s75 = sadd.s32 %s74, 1
    %s76 = scalar_select %p73, %s74, %s75
    %p79 = pneg %p73
    %p80 = scmp.eq.s32.totalorder %s11, 3
    %p81 = por %p79, %p80
    %p82 = scmp.ne.s32.totalorder %s74, %s77
    %p83 = scmp.eq.s32.totalorder %s11, 0
    %p84 = por %p82, %p83
    %p85 = scmp.ne.s32.totalorder %s74, %s77
    %p86 = scmp.eq.s32.totalorder %s16, 3
    %p87 = por %p85, %p86
    %p88 = scmp.ne.s32.totalorder %s77, %s78
    %p89 = scmp.eq.s32.totalorder %s16, 0
    %p90 = por %p88, %p89
    %p91 = scmp.ne.s32.totalorder %s77, %s78
    %p92 = scmp.eq.s32.totalorder %s17, 3
    %p93 = por %p91, %p92
    %p95 = scmp.ne.s32.totalorder %s78, %s94
    %p96 = scmp.eq.s32.totalorder %s17, 0
    %p97 = por %p95, %p96
    %s98 = ssub.s32 %s18, %s37
    %p99 = scmp.eq.s32.totalorder %s98, 0
    %s101 = sadd.s32 %s100, 1
    %s102 = scalar_select %p99, %s100, %s101
    %p105 = pneg %p99
    %p106 = scmp.eq.s32.totalorder %s11, 3
    %p107 = por %p105, %p106
    %p108 = scmp.ne.s32.totalorder %s100, %s103
    %p109 = scmp.eq.s32.totalorder %s11, 0
    %p110 = por %p108, %p109
    %p111 = scmp.ne.s32.totalorder %s100, %s103
    %p112 = scmp.eq.s32.totalorder %s16, 3
    %p113 = por %p111, %p112
    %p114 = scmp.ne.s32.totalorder %s103, %s104
    %p115 = scmp.eq.s32.totalorder %s16, 0
    %p116 = por %p114, %p115
    %p117 = scmp.ne.s32.totalorder %s103, %s104
    %p118 = scmp.eq.s32.totalorder %s17, 3
    %p119 = por %p117, %p118
    %p121 = scmp.ne.s32.totalorder %s104, %s120
    %p122 = scmp.eq.s32.totalorder %s17, 0
    %p123 = por %p121, %p122
    %s124 = ssub.s32 %s18, %s37
    %p125 = scmp.eq.s32.totalorder %s124, 0
    %s127 = sadd.s32 %s126, 1
    %s128 = scalar_select %p125, %s126, %s127
    %p131 = pneg %p125
    %p132 = scmp.eq.s32.totalorder %s11, 3
    %p133 = por %p131, %p132
    %p134 = scmp.ne.s32.totalorder %s126, %s129
    %p135 = scmp.eq.s32.totalorder %s11, 0
    %p136 = por %p134, %p135
    %p137 = scmp.ne.s32.totalorder %s126, %s129
    %p138 = scmp.eq.s32.totalorder %s16, 3
    %p139 = por %p137, %p138
    %p140 = scmp.ne.s32.totalorder %s129, %s130
    %p141 = scmp.eq.s32.totalorder %s16, 0
    %p142 = por %p140, %p141
    %p143 = scmp.ne.s32.totalorder %s129, %s130
    %p144 = scmp.eq.s32.totalorder %s17, 3
    %p145 = por %p143, %p144
    %p147 = scmp.ne.s32.totalorder %s130, %s146
    %p148 = scmp.eq.s32.totalorder %s17, 0
    %p149 = por %p147, %p148
    %s150 = ssub.s32 %s18, %s37
    %p151 = scmp.eq.s32.totalorder %s150, 0
    %s153 = sadd.s32 %s152, 1
    %s154 = scalar_select %p151, %s152, %s153
    %p157 = pneg %p151
    %p158 = scmp.eq.s32.totalorder %s11, 3
    %p159 = por %p157, %p158
    %p160 = scmp.ne.s32.totalorder %s152, %s155
    %p161 = scmp.eq.s32.totalorder %s11, 0
    %p162 = por %p160, %p161
    %p163 = scmp.ne.s32.totalorder %s152, %s155
    %p164 = scmp.eq.s32.totalorder %s16, 3
    %p165 = por %p163, %p164
    %p166 = scmp.ne.s32.totalorder %s155, %s156
    %p167 = scmp.eq.s32.totalorder %s16, 0
    %p168 = por %p166, %p167
    %p169 = scmp.ne.s32.totalorder %s155, %s156
    %p170 = scmp.eq.s32.totalorder %s17, 3
    %p171 = por %p169, %p170
    %p173 = scmp.ne.s32.totalorder %s156, %s172
    %p174 = scmp.eq.s32.totalorder %s17, 0
    %p175 = por %p173, %p174
    %s176 = ssub.s32 %s19, %s33
    %s177 = ssub.s32 %s20, %s29
    %s178 = sor.u32 %s176, %s177
    %s179 = ssub.s32 %s18, %s37
    %s180 = sor.u32 %s178, %s179
    %p181 = scmp.eq.s32.totalorder %s180, 0
    %s183 = sadd.s32 %s182, 1
    %s184 = scalar_select %p181, %s182, %s183
    %p187 = pneg %p181
    %p188 = scmp.eq.s32.totalorder %s11, 3
    %p189 = por %p187, %p188
    %p190 = scmp.ne.s32.totalorder %s182, %s185
    %p191 = scmp.eq.s32.totalorder %s11, 0
    %p192 = por %p190, %p191
    %p193 = scmp.ne.s32.totalorder %s182, %s185
    %p194 = scmp.eq.s32.totalorder %s16, 3
    %p195 = por %p193, %p194
    %p196 = scmp.ne.s32.totalorder %s185, %s186
    %p197 = scmp.eq.s32.totalorder %s16, 0
    %p198 = por %p196, %p197
    %p199 = scmp.ne.s32.totalorder %s185, %s186
    %p200 = scmp.eq.s32.totalorder %s17, 3
    %p201 = por %p199, %p200
    %p203 = scmp.ne.s32.totalorder %s186, %s202
    %p204 = scmp.eq.s32.totalorder %s17, 0
    %p205 = por %p203, %p204
    %p206 = scmp.le.s32.totalorder 1, %s11
    %p207 = scmp.lt.s32.totalorder %s11, 5
    %p208 = pnand %p206, %p207
    %p209 = pneg %p208
    // Predicated region
    $region9: #{conv_bn_silu.1} parent=5 // pred_check
      _
    $region10: #{conv_bn_silu.1} parent=5 // pred_check_branch
      %211 = sbr.rel (%p208) target = $region12
    $region11: #{conv_bn_silu.1} parent=5 // pred_region
      %s212 = ssub.s32 %s11, 1
      // Predicated region
      $region13: #{conv_bn_silu.1} parent=11 // pred_check
        %p213 = pneg %p116
      $region14: #{conv_bn_silu.1} parent=11 // pred_check_branch
        %215 = sbr.rel (%p213) target = $region16
      $region15: #{conv_bn_silu.1} parent=11 // pred_region
        %p216 = scmp.lt.s32.totalorder %s21, 0
        %s217 = scalar_select %p216, %s21, 0
        %s218 = smul.addr %s217, 8
        %s219 = scalar_lea.vmem %s2, %s218
      $region16: #{conv_bn_silu.1} parent=11 // pred_fallthru
        _
      // Predicated region
      $region17: #{conv_bn_silu.1} parent=11 // pred_check
        %p220 = pneg %p142
      $region18: #{conv_bn_silu.1} parent=11 // pred_check_branch
        %222 = sbr.rel (%p220) target = $region20
      $region19: #{conv_bn_silu.1} parent=11 // pred_region
        %p223 = scmp.lt.s32.totalorder %s21, 0
        %s224 = scalar_select %p223, %s21, 0
        %s225 = scalar_lea.vmem %s3, %s224
      $region20: #{conv_bn_silu.1} parent=11 // pred_fallthru
        _
      // Predicated region
      $region21: #{conv_bn_silu.1} parent=11 // pred_check
        %p226 = pneg %p168
      $region22: #{conv_bn_silu.1} parent=11 // pred_check_branch
        %228 = sbr.rel (%p226) target = $region24
      $region23: #{conv_bn_silu.1} parent=11 // pred_region
        %p229 = scmp.lt.s32.totalorder %s21, 0
        %s230 = scalar_select %p229, %s21, 0
        %s231 = scalar_lea.vmem %s4, %s230
      $region24: #{conv_bn_silu.1} parent=11 // pred_fallthru
        _
    $region12: #{conv_bn_silu.1} parent=5 // pred_fallthru
      _
    %p232 = scmp.lt.s32.totalorder %s11, 4
    // Predicated region
    $region25: #{conv_bn_silu.1} parent=5 // pred_check
      %p233 = pneg %p232
    $region26: #{conv_bn_silu.1} parent=5 // pred_check_branch
      %235 = sbr.rel (%p233) target = $region28
    $region27: #{conv_bn_silu.1} parent=5 // pred_region
      // Predicated region
      $region29: #{conv_bn_silu.1} parent=27 // pred_check
        %p236 = pneg %p52
      $region30: #{conv_bn_silu.1} parent=27 // pred_check_branch
        %238 = sbr.rel (%p236) target = $region32
      $region31: #{conv_bn_silu.1} parent=27 // pred_region
        %s239 = smul.u32 8, %s20
        %s240 = ssub.s32 18, %s239
        %p241 = scmp.lt.s32.totalorder %s240, 8
        %s242 = scalar_select %p241, %s240, 8
        %s243 = smul.u32 128, %s242
        %s244 = smul.u32 %s243, 3
        %p245 = scmp.lt.s32.totalorder %s19, 1
        %s246 = scalar_select %p245, %s19, 1
        %p247 = scmp.lt.s32.totalorder %s239, 17
        %s248 = scalar_select %p247, %s239, 17
        %s249 = smul.addr %s248, 3
        %s250 = smul.addr %s246, 54
        %s251 = sadd.s32 %s249, %s250
        %s252 = smul.addr %s251, 8
        %s253 = scalar_lea.vmem %s0, %s252
        %s254 = smul.u32 8, %s20
        %s255 = ssub.s32 18, %s254
        %p256 = scmp.lt.s32.totalorder %s255, 8
        %s257 = scalar_select %p256, %s255, 8
        %s258 = smul.u32 128, %s257
        %s259 = smul.u32 %s258, 3
      $region32: #{conv_bn_silu.1} parent=27 // pred_fallthru
        _
      // Predicated region
      $region33: #{conv_bn_silu.1} parent=27 // pred_check
        %p260 = pneg %p84
      $region34: #{conv_bn_silu.1} parent=27 // pred_check_branch
        %262 = sbr.rel (%p260) target = $region36
      $region35: #{conv_bn_silu.1} parent=27 // pred_region
        %s263 = sadd.s32 %s20, 1
        %s264 = smul.u32 %s263, 4
        %s265 = smul.u32 2, %s264
        %p266 = scmp.lt.s32.totalorder %s19, 1
        %s267 = scalar_select %p266, %s19, 1
        %p268 = scmp.lt.s32.totalorder %s265, 17
        %s269 = scalar_select %p268, %s265, 17
        %s270 = smul.addr %s269, 3
        %s271 = smul.addr %s267, 54
        %s272 = sadd.s32 %s270, %s271
        %s273 = smul.addr %s272, 8
        %s274 = scalar_lea.vmem %s1, %s273
        %s275 = sadd.s32 %s20, 1
        %s276 = smul.u32 %s275, 4
        %s277 = smul.u32 2, %s276
      $region36: #{conv_bn_silu.1} parent=27 // pred_fallthru
        _
    $region28: #{conv_bn_silu.1} parent=5 // pred_fallthru
      _
    %p278 = scmp.le.s32.totalorder 1, %s11
    %p279 = scmp.lt.s32.totalorder %s11, 5
    %p280 = pnand %p278, %p279
    %p281 = pneg %p280
    // Predicated region
    $region37: #{conv_bn_silu.1} parent=5 // pred_check
      _
    $region38: #{conv_bn_silu.1} parent=5 // pred_check_branch
      %283 = sbr.rel (%p280) target = $region40
    $region39: #{conv_bn_silu.1} parent=5 // pred_region
      %s284 = ssub.s32 %s11, 1
      %s285 = smul.u32 8, %s23
      %s286 = ssub.s32 18, %s285
      %p287 = scmp.lt.s32.totalorder %s286, 8
      %s288 = scalar_select %p287, %s286, 8
      %s289 = smul.u32 128, %s288
      %s290 = smul.u32 %s289, 3
      %p291 = scmp.lt.s32.totalorder %s22, 1
      %s292 = scalar_select %p291, %s22, 1
      %p293 = scmp.lt.s32.totalorder %s285, 17
      %s294 = scalar_select %p293, %s285, 17
      %s295 = smul.addr %s294, 3
      %s296 = smul.addr %s292, 54
      %s297 = sadd.s32 %s295, %s296
      %s298 = smul.addr %s297, 8
      %s299 = scalar_lea.vmem %s0, %s298
      %p300 = pneg %p58
      %p301 = pneg %p55
      %s302 = sadd.s32 %s23, 1
      %s303 = smul.u32 %s302, 4
      %s304 = smul.u32 2, %s303
      %p305 = scmp.lt.s32.totalorder %s22, 1
      %s306 = scalar_select %p305, %s22, 1
      %p307 = scmp.lt.s32.totalorder %s304, 17
      %s308 = scalar_select %p307, %s304, 17
      %s309 = smul.addr %s308, 3
      %s310 = smul.addr %s306, 54
      %s311 = sadd.s32 %s309, %s310
      %s312 = smul.addr %s311, 8
      %s313 = scalar_lea.vmem %s1, %s312
      %p314 = pneg %p90
      %p315 = pneg %p87
      %p316 = scmp.lt.s32.totalorder %s21, 0
      %s317 = scalar_select %p316, %s21, 0
      %s318 = smul.addr %s317, 8
      %s319 = scalar_lea.vmem %s2, %s318
      %p320 = pneg %p116
      %p321 = pneg %p113
      %p322 = scmp.lt.s32.totalorder %s21, 0
      %s323 = scalar_select %p322, %s21, 0
      %s324 = scalar_lea.vmem %s3, %s323
      %p325 = pneg %p142
      %p326 = pneg %p139
      %p327 = scmp.lt.s32.totalorder %s21, 0
      %s328 = scalar_select %p327, %s21, 0
      %s329 = scalar_lea.vmem %s4, %s328
      %p330 = pneg %p168
      %p331 = pneg %p165
      %p332 = pneg %p198
      %p333 = pneg %p195
      %p334 = scmp.lt.s32.totalorder %s22, 1
      %s335 = scalar_select %p334, %s22, 1
      %p336 = scmp.lt.s32.totalorder %s23, 1
      %s337 = scalar_select %p336, %s23, 1
      %p338 = scmp.lt.s32.totalorder %s21, 0
      %s339 = scalar_select %p338, %s21, 0
      %s340 = smul.addr %s337, 16
      %s341 = sadd.s32 %s339, %s340
      %s342 = smul.addr %s335, 32
      %s343 = sadd.s32 %s341, %s342
      %s344 = smul.addr %s343, 8
      %s345 = scalar_lea.vmem %s5, %s344
      %s346 = smul.u32 8, %s23
      %s347 = ssub.s32 18, %s346
      %p348 = scmp.lt.s32.totalorder %s347, 8
      %s349 = scalar_select %p348, %s347, 8
      %s350 = smul.u32 128, %s349
      %s351 = smul.u32 %s350, 3
      %p352 = scmp.lt.s32.totalorder %s22, 1
      %s353 = scalar_select %p352, %s22, 1
      %p354 = scmp.lt.s32.totalorder %s346, 17
      %s355 = scalar_select %p354, %s346, 17
      %s356 = smul.addr %s355, 3
      %s357 = smul.addr %s353, 54
      %s358 = sadd.s32 %s356, %s357
      %s359 = smul.addr %s358, 8
      %s360 = scalar_lea.vmem %s0, %s359
      %s361 = smul.u32 8, %s23
      %s362 = ssub.s32 18, %s361
      %p363 = scmp.lt.s32.totalorder %s362, 8
      %s364 = scalar_select %p363, %s362, 8
      %s365 = smul.u32 128, %s364
      %s366 = smul.u32 %s365, 3
      %s367 = sadd.s32 %s23, 1
      %s368 = smul.u32 %s367, 4
      %s369 = smul.u32 2, %s368
      %p370 = scmp.lt.s32.totalorder %s22, 1
      %s371 = scalar_select %p370, %s22, 1
      %p372 = scmp.lt.s32.totalorder %s369, 17
      %s373 = scalar_select %p372, %s369, 17
      %s374 = smul.addr %s373, 3
      %s375 = smul.addr %s371, 54
      %s376 = sadd.s32 %s374, %s375
      %s377 = smul.addr %s376, 8
      %s378 = scalar_lea.vmem %s1, %s377
      %s379 = sadd.s32 %s23, 1
      %s380 = smul.u32 %s379, 4
      %s381 = smul.u32 2, %s380
      %p382 = scmp.lt.s32.totalorder %s21, 0
      %s383 = scalar_select %p382, %s21, 0
      %s384 = smul.addr %s383, 8
      %s385 = scalar_lea.vmem %s2, %s384
      %p386 = scmp.lt.s32.totalorder %s21, 0
      %s387 = scalar_select %p386, %s21, 0
      %s388 = scalar_lea.vmem %s3, %s387
      %p389 = scmp.lt.s32.totalorder %s21, 0
      %s390 = scalar_select %p389, %s21, 0
      %s391 = scalar_lea.vmem %s4, %s390
      %p392 = scmp.lt.s32.totalorder %s22, 1
      %s393 = scalar_select %p392, %s22, 1
      %p394 = scmp.lt.s32.totalorder %s23, 1
      %s395 = scalar_select %p394, %s23, 1
      %p396 = scmp.lt.s32.totalorder %s21, 0
      %s397 = scalar_select %p396, %s21, 0
      %s398 = smul.addr %s395, 16
      %s399 = sadd.s32 %s397, %s398
      %s400 = smul.addr %s393, 32
      %s401 = sadd.s32 %s399, %s400
      %s402 = smul.addr %s401, 8
      %s403 = scalar_lea.vmem %s5, %s402
      %v404 = vld [vmem:[%s360] sm:$0xff]
      %v405 = vld [vmem:[%s360 + $0x8] sm:$0xff]
      %v406 = vld [vmem:[%s360 + $0x10] sm:$0x3]
      %v407 = vld [vmem:[%s360 + $0x18] sm:$0xff]
      %v408 = vld [vmem:[%s360 + $0x20] sm:$0xff]
      %v409 = vld [vmem:[%s360 + $0x28] sm:$0x3]
      %v410 = vld [vmem:[%s360 + $0x30] sm:$0xff]
      %v411 = vld [vmem:[%s360 + $0x38] sm:$0xff]
      %v412 = vld [vmem:[%s360 + $0x40] sm:$0x3]
      %v413 = vld [vmem:[%s360 + $0x48] sm:$0xff]
      %v414 = vld [vmem:[%s360 + $0x50] sm:$0xff]
      %v415 = vld [vmem:[%s360 + $0x58] sm:$0x3]
      %v416 = vld [vmem:[%s360 + $0x60] sm:$0xff]
      %v417 = vld [vmem:[%s360 + $0x68] sm:$0xff]
      %v418 = vld [vmem:[%s360 + $0x70] sm:$0x3]
      %v419 = vld [vmem:[%s360 + $0x78] sm:$0xff]
      %v420 = vld [vmem:[%s360 + $0x80] sm:$0xff]
      %v421 = vld [vmem:[%s360 + $0x88] sm:$0x3]
      %v422 = vld [vmem:[%s360 + $0x90] sm:$0xff]
      %v423 = vld [vmem:[%s360 + $0x98] sm:$0xff]
      %v424 = vld [vmem:[%s360 + $0xa0] sm:$0x3]
      %v425 = vld [vmem:[%s360 + $0xa8] sm:$0xff]
      %v426 = vld [vmem:[%s360 + $0xb0] sm:$0xff]
      %v427 = vld [vmem:[%s360 + $0xb8] sm:$0x3]
      %vm428 = vcmask 31744
      %429 = vst.msk [vmem:[#allocation2] sm:$0xff] %vm428, %v404
      %430 = vst.msk [vmem:[#allocation2 + $0x8] sm:$0xff] %vm428, %v405
      %vm431 = vcmask 25600
      %432 = vst.msk [vmem:[#allocation2 + $0x10] sm:$0x3] %vm431, %v406
      %433 = vst.msk [vmem:[#allocation2 + $0x18] sm:$0xff] %vm428, %v407
      %434 = vst.msk [vmem:[#allocation2 + $0x20] sm:$0xff] %vm428, %v408
      %435 = vst.msk [vmem:[#allocation2 + $0x28] sm:$0x3] %vm431, %v409
      %436 = vst.msk [vmem:[#allocation2 + $0x30] sm:$0xff] %vm428, %v410
      %437 = vst.msk [vmem:[#allocation2 + $0x38] sm:$0xff] %vm428, %v411
      %438 = vst.msk [vmem:[#allocation2 + $0x40] sm:$0x3] %vm431, %v412
      %439 = vst.msk [vmem:[#allocation2 + $0x48] sm:$0xff] %vm428, %v413
      %440 = vst.msk [vmem:[#allocation2 + $0x50] sm:$0xff] %vm428, %v414
      %441 = vst.msk [vmem:[#allocation2 + $0x58] sm:$0x3] %vm431, %v415
      %442 = vst.msk [vmem:[#allocation2 + $0x60] sm:$0xff] %vm428, %v416
      %443 = vst.msk [vmem:[#allocation2 + $0x68] sm:$0xff] %vm428, %v417
      %444 = vst.msk [vmem:[#allocation2 + $0x70] sm:$0x3] %vm431, %v418
      %445 = vst.msk [vmem:[#allocation2 + $0x78] sm:$0xff] %vm428, %v419
      %446 = vst.msk [vmem:[#allocation2 + $0x80] sm:$0xff] %vm428, %v420
      %447 = vst.msk [vmem:[#allocation2 + $0x88] sm:$0x3] %vm431, %v421
      %448 = vst.msk [vmem:[#allocation2 + $0x90] sm:$0xff] %vm428, %v422
      %449 = vst.msk [vmem:[#allocation2 + $0x98] sm:$0xff] %vm428, %v423
      %450 = vst.msk [vmem:[#allocation2 + $0xa0] sm:$0x3] %vm431, %v424
      %451 = vst.msk [vmem:[#allocation2 + $0xa8] sm:$0xff] %vm428, %v425
      %452 = vst.msk [vmem:[#allocation2 + $0xb0] sm:$0xff] %vm428, %v426
      %453 = vst.msk [vmem:[#allocation2 + $0xb8] sm:$0x3] %vm431, %v427
      %v454 = vld [vmem:[%s378] sm:$0xff]
      %v455 = vld [vmem:[%s378 + $0x8] sm:$0xff]
      %v456 = vld [vmem:[%s378 + $0x10] sm:$0x3]
      %v457 = vld [vmem:[%s378 + $0x18] sm:$0xff]
      %v458 = vld [vmem:[%s378 + $0x20] sm:$0xff]
      %v459 = vld [vmem:[%s378 + $0x28] sm:$0x3]
      %s460 = scalar_lea.vmem [#allocation2], 192
      %461 = vst.msk [vmem:[%s460] sm:$0xff] %vm428, %v454
      %462 = vst.msk [vmem:[%s460 + $0x8] sm:$0xff] %vm428, %v455
      %463 = vst.msk [vmem:[%s460 + $0x10] sm:$0x3] %vm431, %v456
      %464 = vst.msk [vmem:[%s460 + $0x18] sm:$0xff] %vm428, %v457
      %465 = vst.msk [vmem:[%s460 + $0x20] sm:$0xff] %vm428, %v458
      %466 = vst.msk [vmem:[%s460 + $0x28] sm:$0x3] %vm431, %v459
      %v467 = vld [vmem:[#allocation2] sm:$0xff]
      %v468 = vld [vmem:[#allocation2 + $0x8] sm:$0xff]
      %v469 = vld [vmem:[#allocation2 + $0x18] sm:$0xff]
      %v470 = vld [vmem:[#allocation2 + $0x20] sm:$0xff]
      %v471 = vld [vmem:[#allocation2 + $0x30] sm:$0xff]
      %v472 = vld [vmem:[#allocation2 + $0x38] sm:$0xff]
      %v473 = vld [vmem:[#allocation2 + $0x48] sm:$0xff]
      %v474 = vld [vmem:[#allocation2 + $0x50] sm:$0xff]
      %v475 = vld [vmem:[#allocation2 + $0x60] sm:$0xff]
      %v476 = vld [vmem:[#allocation2 + $0x68] sm:$0xff]
      %v477 = vld [vmem:[#allocation2 + $0x78] sm:$0xff]
      %v478 = vld [vmem:[#allocation2 + $0x80] sm:$0xff]
      %v479 = vld [vmem:[#allocation2 + $0x90] sm:$0xff]
      %v480 = vld [vmem:[#allocation2 + $0x98] sm:$0xff]
      %v481 = vld [vmem:[#allocation2 + $0xa8] sm:$0xff]
      %v482 = vld [vmem:[#allocation2 + $0xb0] sm:$0xff]
      %483 = vst.msk [vmem:[#allocation3] sm:$0xff] %vm428, %v467
      %484 = vst.msk [vmem:[#allocation3 + $0x8] sm:$0xff] %vm428, %v468
      %485 = vst.msk [vmem:[#allocation3 + $0x10] sm:$0xff] %vm428, %v469
      %486 = vst.msk [vmem:[#allocation3 + $0x18] sm:$0xff] %vm428, %v470
      %487 = vst.msk [vmem:[#allocation3 + $0x20] sm:$0xff] %vm428, %v471
      %488 = vst.msk [vmem:[#allocation3 + $0x28] sm:$0xff] %vm428, %v472
      %489 = vst.msk [vmem:[#allocation3 + $0x30] sm:$0xff] %vm428, %v473
      %490 = vst.msk [vmem:[#allocation3 + $0x38] sm:$0xff] %vm428, %v474
      %491 = vst.msk [vmem:[#allocation3 + $0x40] sm:$0xff] %vm428, %v475
      %492 = vst.msk [vmem:[#allocation3 + $0x48] sm:$0xff] %vm428, %v476
      %493 = vst.msk [vmem:[#allocation3 + $0x50] sm:$0xff] %vm428, %v477
      %494 = vst.msk [vmem:[#allocation3 + $0x58] sm:$0xff] %vm428, %v478
      %495 = vst.msk [vmem:[#allocation3 + $0x60] sm:$0xff] %vm428, %v479
      %496 = vst.msk [vmem:[#allocation3 + $0x68] sm:$0xff] %vm428, %v480
      %497 = vst.msk [vmem:[#allocation3 + $0x70] sm:$0xff] %vm428, %v481
      %498 = vst.msk [vmem:[#allocation3 + $0x78] sm:$0xff] %vm428, %v482
      %v499 = vld [vmem:[#allocation2 + $0x1] sm:$0xff]
      %v500 = vld [vmem:[#allocation2 + $0x9] sm:$0xff]
      %v501 = vld [vmem:[#allocation2 + $0x19] sm:$0xff]
      %v502 = vld [vmem:[#allocation2 + $0x21] sm:$0xff]
      %v503 = vld [vmem:[#allocation2 + $0x31] sm:$0xff]
      %v504 = vld [vmem:[#allocation2 + $0x39] sm:$0xff]
      %v505 = vld [vmem:[#allocation2 + $0x49] sm:$0xff]
      %v506 = vld [vmem:[#allocation2 + $0x51] sm:$0xff]
      %v507 = vld [vmem:[#allocation2 + $0x61] sm:$0xff]
      %v508 = vld [vmem:[#allocation2 + $0x69] sm:$0xff]
      %v509 = vld [vmem:[#allocation2 + $0x79] sm:$0xff]
      %v510 = vld [vmem:[#allocation2 + $0x81] sm:$0xff]
      %v511 = vld [vmem:[#allocation2 + $0x91] sm:$0xff]
      %v512 = vld [vmem:[#allocation2 + $0x99] sm:$0xff]
      %v513 = vld [vmem:[#allocation2 + $0xa9] sm:$0xff]
      %v514 = vld [vmem:[#allocation2 + $0xb1] sm:$0xff]
      %531 = vrot.lane.b32.xlu0 %v499, 4
      %v532 = vpop.permute.xlu0 %531
      %533 = vrot.lane.b32.xlu0 %v500, 4
      %v534 = vpop.permute.xlu0 %533
      %535 = vrot.lane.b32.xlu0 %v501, 4
      %v536 = vpop.permute.xlu0 %535
      %537 = vrot.lane.b32.xlu0 %v502, 4
      %v538 = vpop.permute.xlu0 %537
      %539 = vrot.lane.b32.xlu0 %v503, 4
      %v540 = vpop.permute.xlu0 %539
      %541 = vrot.lane.b32.xlu0 %v504, 4
      %v542 = vpop.permute.xlu0 %541
      %543 = vrot.lane.b32.xlu0 %v505, 4
      %v544 = vpop.permute.xlu0 %543
      %545 = vrot.lane.b32.xlu0 %v506, 4
      %v546 = vpop.permute.xlu0 %545
      %547 = vrot.lane.b32.xlu0 %v507, 4
      %v548 = vpop.permute.xlu0 %547
      %549 = vrot.lane.b32.xlu0 %v508, 4
      %v550 = vpop.permute.xlu0 %549
      %551 = vrot.lane.b32.xlu0 %v509, 4
      %v552 = vpop.permute.xlu0 %551
      %553 = vrot.lane.b32.xlu0 %v510, 4
      %v554 = vpop.permute.xlu0 %553
      %555 = vrot.lane.b32.xlu0 %v511, 4
      %v556 = vpop.permute.xlu0 %555
      %557 = vrot.lane.b32.xlu0 %v512, 4
      %v558 = vpop.permute.xlu0 %557
      %559 = vrot.lane.b32.xlu0 %v513, 4
      %v560 = vpop.permute.xlu0 %559
      %561 = vrot.lane.b32.xlu0 %v514, 4
      %v562 = vpop.permute.xlu0 %561
      %vm579 = vcmask 64544
      %580 = vst.msk [vmem:[#allocation3] sm:$0xff] %vm579, %v532
      %581 = vst.msk [vmem:[#allocation3 + $0x8] sm:$0xff] %vm579, %v534
      %582 = vst.msk [vmem:[#allocation3 + $0x10] sm:$0xff] %vm579, %v536
      %583 = vst.msk [vmem:[#allocation3 + $0x18] sm:$0xff] %vm579, %v538
      %584 = vst.msk [vmem:[#allocation3 + $0x20] sm:$0xff] %vm579, %v540
      %585 = vst.msk [vmem:[#allocation3 + $0x28] sm:$0xff] %vm579, %v542
      %586 = vst.msk [vmem:[#allocation3 + $0x30] sm:$0xff] %vm579, %v544
      %587 = vst.msk [vmem:[#allocation3 + $0x38] sm:$0xff] %vm579, %v546
      %588 = vst.msk [vmem:[#allocation3 + $0x40] sm:$0xff] %vm579, %v548
      %589 = vst.msk [vmem:[#allocation3 + $0x48] sm:$0xff] %vm579, %v550
      %590 = vst.msk [vmem:[#allocation3 + $0x50] sm:$0xff] %vm579, %v552
      %591 = vst.msk [vmem:[#allocation3 + $0x58] sm:$0xff] %vm579, %v554
      %592 = vst.msk [vmem:[#allocation3 + $0x60] sm:$0xff] %vm579, %v556
      %593 = vst.msk [vmem:[#allocation3 + $0x68] sm:$0xff] %vm579, %v558
      %594 = vst.msk [vmem:[#allocation3 + $0x70] sm:$0xff] %vm579, %v560
      %595 = vst.msk [vmem:[#allocation3 + $0x78] sm:$0xff] %vm579, %v562
      %v596 = vld [vmem:[#allocation2 + $0x2] sm:$0xff]
      %v597 = vld [vmem:[#allocation2 + $0xa] sm:$0xff]
      %v598 = vld [vmem:[#allocation2 + $0x1a] sm:$0xff]
      %v599 = vld [vmem:[#allocation2 + $0x22] sm:$0xff]
      %v600 = vld [vmem:[#allocation2 + $0x32] sm:$0xff]
      %v601 = vld [vmem:[#allocation2 + $0x3a] sm:$0xff]
      %v602 = vld [vmem:[#allocation2 + $0x4a] sm:$0xff]
      %v603 = vld [vmem:[#allocation2 + $0x52] sm:$0xff]
      %v604 = vld [vmem:[#allocation2 + $0x62] sm:$0xff]
      %v605 = vld [vmem:[#allocation2 + $0x6a] sm:$0xff]
      %v606 = vld [vmem:[#allocation2 + $0x7a] sm:$0xff]
      %v607 = vld [vmem:[#allocation2 + $0x82] sm:$0xff]
      %v608 = vld [vmem:[#allocation2 + $0x92] sm:$0xff]
      %v609 = vld [vmem:[#allocation2 + $0x9a] sm:$0xff]
      %v610 = vld [vmem:[#allocation2 + $0xaa] sm:$0xff]
      %v611 = vld [vmem:[#allocation2 + $0xb2] sm:$0xff]
      %628 = vrot.lane.b32.xlu0 %v596, 8
      %v629 = vpop.permute.xlu0 %628
      %630 = vrot.lane.b32.xlu0 %v597, 8
      %v631 = vpop.permute.xlu0 %630
      %632 = vrot.lane.b32.xlu0 %v598, 8
      %v633 = vpop.permute.xlu0 %632
      %634 = vrot.lane.b32.xlu0 %v599, 8
      %v635 = vpop.permute.xlu0 %634
      %636 = vrot.lane.b32.xlu0 %v600, 8
      %v637 = vpop.permute.xlu0 %636
      %638 = vrot.lane.b32.xlu0 %v601, 8
      %v639 = vpop.permute.xlu0 %638
      %640 = vrot.lane.b32.xlu0 %v602, 8
      %v641 = vpop.permute.xlu0 %640
      %642 = vrot.lane.b32.xlu0 %v603, 8
      %v643 = vpop.permute.xlu0 %642
      %644 = vrot.lane.b32.xlu0 %v604, 8
      %v645 = vpop.permute.xlu0 %644
      %646 = vrot.lane.b32.xlu0 %v605, 8
      %v647 = vpop.permute.xlu0 %646
      %648 = vrot.lane.b32.xlu0 %v606, 8
      %v649 = vpop.permute.xlu0 %648
      %650 = vrot.lane.b32.xlu0 %v607, 8
      %v651 = vpop.permute.xlu0 %650
      %652 = vrot.lane.b32.xlu0 %v608, 8
      %v653 = vpop.permute.xlu0 %652
      %654 = vrot.lane.b32.xlu0 %v609, 8
      %v655 = vpop.permute.xlu0 %654
      %656 = vrot.lane.b32.xlu0 %v610, 8
      %v657 = vpop.permute.xlu0 %656
      %658 = vrot.lane.b32.xlu0 %v611, 8
      %v659 = vpop.permute.xlu0 %658
      %vm676 = vcmask 97344
      %677 = vst.msk [vmem:[#allocation3] sm:$0xff] %vm676, %v629
      %678 = vst.msk [vmem:[#allocation3 + $0x8] sm:$0xff] %vm676, %v631
      %679 = vst.msk [vmem:[#allocation3 + $0x10] sm:$0xff] %vm676, %v633
      %680 = vst.msk [vmem:[#allocation3 + $0x18] sm:$0xff] %vm676, %v635
      %681 = vst.msk [vmem:[#allocation3 + $0x20] sm:$0xff] %vm676, %v637
      %682 = vst.msk [vmem:[#allocation3 + $0x28] sm:$0xff] %vm676, %v639
      %683 = vst.msk [vmem:[#allocation3 + $0x30] sm:$0xff] %vm676, %v641
      %684 = vst.msk [vmem:[#allocation3 + $0x38] sm:$0xff] %vm676, %v643
      %685 = vst.msk [vmem:[#allocation3 + $0x40] sm:$0xff] %vm676, %v645
      %686 = vst.msk [vmem:[#allocation3 + $0x48] sm:$0xff] %vm676, %v647
      %687 = vst.msk [vmem:[#allocation3 + $0x50] sm:$0xff] %vm676, %v649
      %688 = vst.msk [vmem:[#allocation3 + $0x58] sm:$0xff] %vm676, %v651
      %689 = vst.msk [vmem:[#allocation3 + $0x60] sm:$0xff] %vm676, %v653
      %690 = vst.msk [vmem:[#allocation3 + $0x68] sm:$0xff] %vm676, %v655
      %691 = vst.msk [vmem:[#allocation3 + $0x70] sm:$0xff] %vm676, %v657
      %692 = vst.msk [vmem:[#allocation3 + $0x78] sm:$0xff] %vm676, %v659
      %s693 = scalar_lea.vmem [#allocation2], 24
      %v694 = vld [vmem:[%s693] sm:$0xff]
      %v695 = vld [vmem:[%s693 + $0x8] sm:$0xff]
      %v696 = vld [vmem:[%s693 + $0x18] sm:$0xff]
      %v697 = vld [vmem:[%s693 + $0x20] sm:$0xff]
      %v698 = vld [vmem:[%s693 + $0x30] sm:$0xff]
      %v699 = vld [vmem:[%s693 + $0x38] sm:$0xff]
      %v700 = vld [vmem:[%s693 + $0x48] sm:$0xff]
      %v701 = vld [vmem:[%s693 + $0x50] sm:$0xff]
      %v702 = vld [vmem:[%s693 + $0x60] sm:$0xff]
      %v703 = vld [vmem:[%s693 + $0x68] sm:$0xff]
      %v704 = vld [vmem:[%s693 + $0x78] sm:$0xff]
      %v705 = vld [vmem:[%s693 + $0x80] sm:$0xff]
      %v706 = vld [vmem:[%s693 + $0x90] sm:$0xff]
      %v707 = vld [vmem:[%s693 + $0x98] sm:$0xff]
      %v708 = vld [vmem:[%s693 + $0xa8] sm:$0xff]
      %v709 = vld [vmem:[%s693 + $0xb0] sm:$0xff]
      %726 = vrot.lane.b32.xlu0 %v694, 12
      %v727 = vpop.permute.xlu0 %726
      %728 = vrot.lane.b32.xlu0 %v695, 12
      %v729 = vpop.permute.xlu0 %728
      %730 = vrot.lane.b32.xlu0 %v696, 12
      %v731 = vpop.permute.xlu0 %730
      %732 = vrot.lane.b32.xlu0 %v697, 12
      %v733 = vpop.permute.xlu0 %732
      %734 = vrot.lane.b32.xlu0 %v698, 12
      %v735 = vpop.permute.xlu0 %734
      %736 = vrot.lane.b32.xlu0 %v699, 12
      %v737 = vpop.permute.xlu0 %736
      %738 = vrot.lane.b32.xlu0 %v700, 12
      %v739 = vpop.permute.xlu0 %738
      %740 = vrot.lane.b32.xlu0 %v701, 12
      %v741 = vpop.permute.xlu0 %740
      %742 = vrot.lane.b32.xlu0 %v702, 12
      %v743 = vpop.permute.xlu0 %742
      %744 = vrot.lane.b32.xlu0 %v703, 12
      %v745 = vpop.permute.xlu0 %744
      %746 = vrot.lane.b32.xlu0 %v704, 12
      %v747 = vpop.permute.xlu0 %746
      %748 = vrot.lane.b32.xlu0 %v705, 12
      %v749 = vpop.permute.xlu0 %748
      %750 = vrot.lane.b32.xlu0 %v706, 12
      %v751 = vpop.permute.xlu0 %750
      %752 = vrot.lane.b32.xlu0 %v707, 12
      %v753 = vpop.permute.xlu0 %752
      %754 = vrot.lane.b32.xlu0 %v708, 12
      %v755 = vpop.permute.xlu0 %754
      %756 = vrot.lane.b32.xlu0 %v709, 12
      %v757 = vpop.permute.xlu0 %756
      %vm774 = vcmask 130144
      %775 = vst.msk [vmem:[#allocation3] sm:$0xff] %vm774, %v727
      %776 = vst.msk [vmem:[#allocation3 + $0x8] sm:$0xff] %vm774, %v729
      %777 = vst.msk [vmem:[#allocation3 + $0x10] sm:$0xff] %vm774, %v731
      %778 = vst.msk [vmem:[#allocation3 + $0x18] sm:$0xff] %vm774, %v733
      %779 = vst.msk [vmem:[#allocation3 + $0x20] sm:$0xff] %vm774, %v735
      %780 = vst.msk [vmem:[#allocation3 + $0x28] sm:$0xff] %vm774, %v737
      %781 = vst.msk [vmem:[#allocation3 + $0x30] sm:$0xff] %vm774, %v739
      %782 = vst.msk [vmem:[#allocation3 + $0x38] sm:$0xff] %vm774, %v741
      %783 = vst.msk [vmem:[#allocation3 + $0x40] sm:$0xff] %vm774, %v743
      %784 = vst.msk [vmem:[#allocation3 + $0x48] sm:$0xff] %vm774, %v745
      %785 = vst.msk [vmem:[#allocation3 + $0x50] sm:$0xff] %vm774, %v747
      %786 = vst.msk [vmem:[#allocation3 + $0x58] sm:$0xff] %vm774, %v749
      %787 = vst.msk [vmem:[#allocation3 + $0x60] sm:$0xff] %vm774, %v751
      %788 = vst.msk [vmem:[#allocation3 + $0x68] sm:$0xff] %vm774, %v753
      %789 = vst.msk [vmem:[#allocation3 + $0x70] sm:$0xff] %vm774, %v755
      %790 = vst.msk [vmem:[#allocation3 + $0x78] sm:$0xff] %vm774, %v757
      %v791 = vld [vmem:[%s693 + $0x1] sm:$0xff]
      %v792 = vld [vmem:[%s693 + $0x9] sm:$0xff]
      %v793 = vld [vmem:[%s693 + $0x19] sm:$0xff]
      %v794 = vld [vmem:[%s693 + $0x21] sm:$0xff]
      %v795 = vld [vmem:[%s693 + $0x31] sm:$0xff]
      %v796 = vld [vmem:[%s693 + $0x39] sm:$0xff]
      %v797 = vld [vmem:[%s693 + $0x49] sm:$0xff]
      %v798 = vld [vmem:[%s693 + $0x51] sm:$0xff]
      %v799 = vld [vmem:[%s693 + $0x61] sm:$0xff]
      %v800 = vld [vmem:[%s693 + $0x69] sm:$0xff]
      %v801 = vld [vmem:[%s693 + $0x79] sm:$0xff]
      %v802 = vld [vmem:[%s693 + $0x81] sm:$0xff]
      %v803 = vld [vmem:[%s693 + $0x91] sm:$0xff]
      %v804 = vld [vmem:[%s693 + $0x99] sm:$0xff]
      %v805 = vld [vmem:[%s693 + $0xa9] sm:$0xff]
      %v806 = vld [vmem:[%s693 + $0xb1] sm:$0xff]
      %823 = vrot.lane.b32.xlu0 %v791, 16
      %v824 = vpop.permute.xlu0 %823
      %825 = vrot.lane.b32.xlu0 %v792, 16
      %v826 = vpop.permute.xlu0 %825
      %827 = vrot.lane.b32.xlu0 %v793, 16
      %v828 = vpop.permute.xlu0 %827
      %829 = vrot.lane.b32.xlu0 %v794, 16
      %v830 = vpop.permute.xlu0 %829
      %831 = vrot.lane.b32.xlu0 %v795, 16
      %v832 = vpop.permute.xlu0 %831
      %833 = vrot.lane.b32.xlu0 %v796, 16
      %v834 = vpop.permute.xlu0 %833
      %835 = vrot.lane.b32.xlu0 %v797, 16
      %v836 = vpop.permute.xlu0 %835
      %837 = vrot.lane.b32.xlu0 %v798, 16
      %v838 = vpop.permute.xlu0 %837
      %839 = vrot.lane.b32.xlu0 %v799, 16
      %v840 = vpop.permute.xlu0 %839
      %841 = vrot.lane.b32.xlu0 %v800, 16
      %v842 = vpop.permute.xlu0 %841
      %843 = vrot.lane.b32.xlu0 %v801, 16
      %v844 = vpop.permute.xlu0 %843
      %845 = vrot.lane.b32.xlu0 %v802, 16
      %v846 = vpop.permute.xlu0 %845
      %847 = vrot.lane.b32.xlu0 %v803, 16
      %v848 = vpop.permute.xlu0 %847
      %849 = vrot.lane.b32.xlu0 %v804, 16
      %v850 = vpop.permute.xlu0 %849
      %851 = vrot.lane.b32.xlu0 %v805, 16
      %v852 = vpop.permute.xlu0 %851
      %853 = vrot.lane.b32.xlu0 %v806, 16
      %v854 = vpop.permute.xlu0 %853
      %vm871 = vcmask 162944
      %872 = vst.msk [vmem:[#allocation3] sm:$0xff] %vm871, %v824
      %873 = vst.msk [vmem:[#allocation3 + $0x8] sm:$0xff] %vm871, %v826
      %874 = vst.msk [vmem:[#allocation3 + $0x10] sm:$0xff] %vm871, %v828
      %875 = vst.msk [vmem:[#allocation3 + $0x18] sm:$0xff] %vm871, %v830
      %876 = vst.msk [vmem:[#allocation3 + $0x20] sm:$0xff] %vm871, %v832
      %877 = vst.msk [vmem:[#allocation3 + $0x28] sm:$0xff] %vm871, %v834
      %878 = vst.msk [vmem:[#allocation3 + $0x30] sm:$0xff] %vm871, %v836
      %879 = vst.msk [vmem:[#allocation3 + $0x38] sm:$0xff] %vm871, %v838
      %880 = vst.msk [vmem:[#allocation3 + $0x40] sm:$0xff] %vm871, %v840
      %881 = vst.msk [vmem:[#allocation3 + $0x48] sm:$0xff] %vm871, %v842
      %882 = vst.msk [vmem:[#allocation3 + $0x50] sm:$0xff] %vm871, %v844
      %883 = vst.msk [vmem:[#allocation3 + $0x58] sm:$0xff] %vm871, %v846
      %884 = vst.msk [vmem:[#allocation3 + $0x60] sm:$0xff] %vm871, %v848
      %885 = vst.msk [vmem:[#allocation3 + $0x68] sm:$0xff] %vm871, %v850
      %886 = vst.msk [vmem:[#allocation3 + $0x70] sm:$0xff] %vm871, %v852
      %887 = vst.msk [vmem:[#allocation3 + $0x78] sm:$0xff] %vm871, %v854
      %v888 = vld [vmem:[%s693 + $0x2] sm:$0xff]
      %v889 = vld [vmem:[%s693 + $0xa] sm:$0xff]
      %v890 = vld [vmem:[%s693 + $0x1a] sm:$0xff]
      %v891 = vld [vmem:[%s693 + $0x22] sm:$0xff]
      %v892 = vld [vmem:[%s693 + $0x32] sm:$0xff]
      %v893 = vld [vmem:[%s693 + $0x3a] sm:$0xff]
      %v894 = vld [vmem:[%s693 + $0x4a] sm:$0xff]
      %v895 = vld [vmem:[%s693 + $0x52] sm:$0xff]
      %v896 = vld [vmem:[%s693 + $0x62] sm:$0xff]
      %v897 = vld [vmem:[%s693 + $0x6a] sm:$0xff]
      %v898 = vld [vmem:[%s693 + $0x7a] sm:$0xff]
      %v899 = vld [vmem:[%s693 + $0x82] sm:$0xff]
      %v900 = vld [vmem:[%s693 + $0x92] sm:$0xff]
      %v901 = vld [vmem:[%s693 + $0x9a] sm:$0xff]
      %v902 = vld [vmem:[%s693 + $0xaa] sm:$0xff]
      %v903 = vld [vmem:[%s693 + $0xb2] sm:$0xff]
      %920 = vrot.lane.b32.xlu0 %v888, 20
      %v921 = vpop.permute.xlu0 %920
      %922 = vrot.lane.b32.xlu0 %v889, 20
      %v923 = vpop.permute.xlu0 %922
      %924 = vrot.lane.b32.xlu0 %v890, 20
      %v925 = vpop.permute.xlu0 %924
      %926 = vrot.lane.b32.xlu0 %v891, 20
      %v927 = vpop.permute.xlu0 %926
      %928 = vrot.lane.b32.xlu0 %v892, 20
      %v929 = vpop.permute.xlu0 %928
      %930 = vrot.lane.b32.xlu0 %v893, 20
      %v931 = vpop.permute.xlu0 %930
      %932 = vrot.lane.b32.xlu0 %v894, 20
      %v933 = vpop.permute.xlu0 %932
      %934 = vrot.lane.b32.xlu0 %v895, 20
      %v935 = vpop.permute.xlu0 %934
      %936 = vrot.lane.b32.xlu0 %v896, 20
      %v937 = vpop.permute.xlu0 %936
      %938 = vrot.lane.b32.xlu0 %v897, 20
      %v939 = vpop.permute.xlu0 %938
      %940 = vrot.lane.b32.xlu0 %v898, 20
      %v941 = vpop.permute.xlu0 %940
      %942 = vrot.lane.b32.xlu0 %v899, 20
      %v943 = vpop.permute.xlu0 %942
      %944 = vrot.lane.b32.xlu0 %v900, 20
      %v945 = vpop.permute.xlu0 %944
      %946 = vrot.lane.b32.xlu0 %v901, 20
      %v947 = vpop.permute.xlu0 %946
      %948 = vrot.lane.b32.xlu0 %v902, 20
      %v949 = vpop.permute.xlu0 %948
      %950 = vrot.lane.b32.xlu0 %v903, 20
      %v951 = vpop.permute.xlu0 %950
      %vm968 = vcmask 195744
      %969 = vst.msk [vmem:[#allocation3] sm:$0xff] %vm968, %v921
      %970 = vst.msk [vmem:[#allocation3 + $0x8] sm:$0xff] %vm968, %v923
      %971 = vst.msk [vmem:[#allocation3 + $0x10] sm:$0xff] %vm968, %v925
      %972 = vst.msk [vmem:[#allocation3 + $0x18] sm:$0xff] %vm968, %v927
      %973 = vst.msk [vmem:[#allocation3 + $0x20] sm:$0xff] %vm968, %v929
      %974 = vst.msk [vmem:[#allocation3 + $0x28] sm:$0xff] %vm968, %v931
      %975 = vst.msk [vmem:[#allocation3 + $0x30] sm:$0xff] %vm968, %v933
      %976 = vst.msk [vmem:[#allocation3 + $0x38] sm:$0xff] %vm968, %v935
      %977 = vst.msk [vmem:[#allocation3 + $0x40] sm:$0xff] %vm968, %v937
      %978 = vst.msk [vmem:[#allocation3 + $0x48] sm:$0xff] %vm968, %v939
      %979 = vst.msk [vmem:[#allocation3 + $0x50] sm:$0xff] %vm968, %v941
      %980 = vst.msk [vmem:[#allocation3 + $0x58] sm:$0xff] %vm968, %v943
      %981 = vst.msk [vmem:[#allocation3 + $0x60] sm:$0xff] %vm968, %v945
      %982 = vst.msk [vmem:[#allocation3 + $0x68] sm:$0xff] %vm968, %v947
      %983 = vst.msk [vmem:[#allocation3 + $0x70] sm:$0xff] %vm968, %v949
      %984 = vst.msk [vmem:[#allocation3 + $0x78] sm:$0xff] %vm968, %v951
      %s985 = scalar_lea.vmem [#allocation2], 48
      %v986 = vld [vmem:[%s985] sm:$0xff]
      %v987 = vld [vmem:[%s985 + $0x8] sm:$0xff]
      %v988 = vld [vmem:[%s985 + $0x18] sm:$0xff]
      %v989 = vld [vmem:[%s985 + $0x20] sm:$0xff]
      %v990 = vld [vmem:[%s985 + $0x30] sm:$0xff]
      %v991 = vld [vmem:[%s985 + $0x38] sm:$0xff]
      %v992 = vld [vmem:[%s985 + $0x48] sm:$0xff]
      %v993 = vld [vmem:[%s985 + $0x50] sm:$0xff]
      %v994 = vld [vmem:[%s985 + $0x60] sm:$0xff]
      %v995 = vld [vmem:[%s985 + $0x68] sm:$0xff]
      %v996 = vld [vmem:[%s985 + $0x78] sm:$0xff]
      %v997 = vld [vmem:[%s985 + $0x80] sm:$0xff]
      %v998 = vld [vmem:[%s985 + $0x90] sm:$0xff]
      %v999 = vld [vmem:[%s985 + $0x98] sm:$0xff]
      %v1000 = vld [vmem:[%s985 + $0xa8] sm:$0xff]
      %v1001 = vld [vmem:[%s985 + $0xb0] sm:$0xff]
      %1018 = vrot.lane.b32.xlu0 %v986, 24
      %v1019 = vpop.permute.xlu0 %1018
      %1020 = vrot.lane.b32.xlu0 %v987, 24
      %v1021 = vpop.permute.xlu0 %1020
      %1022 = vrot.lane.b32.xlu0 %v988, 24
      %v1023 = vpop.permute.xlu0 %1022
      %1024 = vrot.lane.b32.xlu0 %v989, 24
      %v1025 = vpop.permute.xlu0 %1024
      %1026 = vrot.lane.b32.xlu0 %v990, 24
      %v1027 = vpop.permute.xlu0 %1026
      %1028 = vrot.lane.b32.xlu0 %v991, 24
      %v1029 = vpop.permute.xlu0 %1028
      %1030 = vrot.lane.b32.xlu0 %v992, 24
      %v1031 = vpop.permute.xlu0 %1030
      %1032 = vrot.lane.b32.xlu0 %v993, 24
      %v1033 = vpop.permute.xlu0 %1032
      %1034 = vrot.lane.b32.xlu0 %v994, 24
      %v1035 = vpop.permute.xlu0 %1034
      %1036 = vrot.lane.b32.xlu0 %v995, 24
      %v1037 = vpop.permute.xlu0 %1036
      %1038 = vrot.lane.b32.xlu0 %v996, 24
      %v1039 = vpop.permute.xlu0 %1038
      %1040 = vrot.lane.b32.xlu0 %v997, 24
      %v1041 = vpop.permute.xlu0 %1040
      %1042 = vrot.lane.b32.xlu0 %v998, 24
      %v1043 = vpop.permute.xlu0 %1042
      %1044 = vrot.lane.b32.xlu0 %v999, 24
      %v1045 = vpop.permute.xlu0 %1044
      %1046 = vrot.lane.b32.xlu0 %v1000, 24
      %v1047 = vpop.permute.xlu0 %1046
      %1048 = vrot.lane.b32.xlu0 %v1001, 24
      %v1049 = vpop.permute.xlu0 %1048
      %vm1066 = vcmask 228544
      %1067 = vst.msk [vmem:[#allocation3] sm:$0xff] %vm1066, %v1019
      %1068 = vst.msk [vmem:[#allocation3 + $0x8] sm:$0xff] %vm1066, %v1021
      %1069 = vst.msk [vmem:[#allocation3 + $0x10] sm:$0xff] %vm1066, %v1023
      %1070 = vst.msk [vmem:[#allocation3 + $0x18] sm:$0xff] %vm1066, %v1025
      %1071 = vst.msk [vmem:[#allocation3 + $0x20] sm:$0xff] %vm1066, %v1027
      %1072 = vst.msk [vmem:[#allocation3 + $0x28] sm:$0xff] %vm1066, %v1029
      %1073 = vst.msk [vmem:[#allocation3 + $0x30] sm:$0xff] %vm1066, %v1031
      %1074 = vst.msk [vmem:[#allocation3 + $0x38] sm:$0xff] %vm1066, %v1033
      %1075 = vst.msk [vmem:[#allocation3 + $0x40] sm:$0xff] %vm1066, %v1035
      %1076 = vst.msk [vmem:[#allocation3 + $0x48] sm:$0xff] %vm1066, %v1037
      %1077 = vst.msk [vmem:[#allocation3 + $0x50] sm:$0xff] %vm1066, %v1039
      %1078 = vst.msk [vmem:[#allocation3 + $0x58] sm:$0xff] %vm1066, %v1041
      %1079 = vst.msk [vmem:[#allocation3 + $0x60] sm:$0xff] %vm1066, %v1043
      %1080 = vst.msk [vmem:[#allocation3 + $0x68] sm:$0xff] %vm1066, %v1045
      %1081 = vst.msk [vmem:[#allocation3 + $0x70] sm:$0xff] %vm1066, %v1047
      %1082 = vst.msk [vmem:[#allocation3 + $0x78] sm:$0xff] %vm1066, %v1049
      %v1083 = vld [vmem:[%s985 + $0x1] sm:$0xff]
      %v1084 = vld [vmem:[%s985 + $0x9] sm:$0xff]
      %v1085 = vld [vmem:[%s985 + $0x19] sm:$0xff]
      %v1086 = vld [vmem:[%s985 + $0x21] sm:$0xff]
      %v1087 = vld [vmem:[%s985 + $0x31] sm:$0xff]
      %v1088 = vld [vmem:[%s985 + $0x39] sm:$0xff]
      %v1089 = vld [vmem:[%s985 + $0x49] sm:$0xff]
      %v1090 = vld [vmem:[%s985 + $0x51] sm:$0xff]
      %v1091 = vld [vmem:[%s985 + $0x61] sm:$0xff]
      %v1092 = vld [vmem:[%s985 + $0x69] sm:$0xff]
      %v1093 = vld [vmem:[%s985 + $0x79] sm:$0xff]
      %v1094 = vld [vmem:[%s985 + $0x81] sm:$0xff]
      %v1095 = vld [vmem:[%s985 + $0x91] sm:$0xff]
      %v1096 = vld [vmem:[%s985 + $0x99] sm:$0xff]
      %v1097 = vld [vmem:[%s985 + $0xa9] sm:$0xff]
      %v1098 = vld [vmem:[%s985 + $0xb1] sm:$0xff]
      %1115 = vrot.lane.b32.xlu0 %v1083, 28
      %v1116 = vpop.permute.xlu0 %1115
      %1117 = vrot.lane.b32.xlu0 %v1084, 28
      %v1118 = vpop.permute.xlu0 %1117
      %1119 = vrot.lane.b32.xlu0 %v1085, 28
      %v1120 = vpop.permute.xlu0 %1119
      %1121 = vrot.lane.b32.xlu0 %v1086, 28
      %v1122 = vpop.permute.xlu0 %1121
      %1123 = vrot.lane.b32.xlu0 %v1087, 28
      %v1124 = vpop.permute.xlu0 %1123
      %1125 = vrot.lane.b32.xlu0 %v1088, 28
      %v1126 = vpop.permute.xlu0 %1125
      %1127 = vrot.lane.b32.xlu0 %v1089, 28
      %v1128 = vpop.permute.xlu0 %1127
      %1129 = vrot.lane.b32.xlu0 %v1090, 28
      %v1130 = vpop.permute.xlu0 %1129
      %1131 = vrot.lane.b32.xlu0 %v1091, 28
      %v1132 = vpop.permute.xlu0 %1131
      %1133 = vrot.lane.b32.xlu0 %v1092, 28
      %v1134 = vpop.permute.xlu0 %1133
      %1135 = vrot.lane.b32.xlu0 %v1093, 28
      %v1136 = vpop.permute.xlu0 %1135
      %1137 = vrot.lane.b32.xlu0 %v1094, 28
      %v1138 = vpop.permute.xlu0 %1137
      %1139 = vrot.lane.b32.xlu0 %v1095, 28
      %v1140 = vpop.permute.xlu0 %1139
      %1141 = vrot.lane.b32.xlu0 %v1096, 28
      %v1142 = vpop.permute.xlu0 %1141
      %1143 = vrot.lane.b32.xlu0 %v1097, 28
      %v1144 = vpop.permute.xlu0 %1143
      %1145 = vrot.lane.b32.xlu0 %v1098, 28
      %v1146 = vpop.permute.xlu0 %1145
      %vm1163 = vcmask 261344
      %1164 = vst.msk [vmem:[#allocation3] sm:$0xff] %vm1163, %v1116
      %1165 = vst.msk [vmem:[#allocation3 + $0x8] sm:$0xff] %vm1163, %v1118
      %1166 = vst.msk [vmem:[#allocation3 + $0x10] sm:$0xff] %vm1163, %v1120
      %1167 = vst.msk [vmem:[#allocation3 + $0x18] sm:$0xff] %vm1163, %v1122
      %1168 = vst.msk [vmem:[#allocation3 + $0x20] sm:$0xff] %vm1163, %v1124
      %1169 = vst.msk [vmem:[#allocation3 + $0x28] sm:$0xff] %vm1163, %v1126
      %1170 = vst.msk [vmem:[#allocation3 + $0x30] sm:$0xff] %vm1163, %v1128
      %1171 = vst.msk [vmem:[#allocation3 + $0x38] sm:$0xff] %vm1163, %v1130
      %1172 = vst.msk [vmem:[#allocation3 + $0x40] sm:$0xff] %vm1163, %v1132
      %1173 = vst.msk [vmem:[#allocation3 + $0x48] sm:$0xff] %vm1163, %v1134
      %1174 = vst.msk [vmem:[#allocation3 + $0x50] sm:$0xff] %vm1163, %v1136
      %1175 = vst.msk [vmem:[#allocation3 + $0x58] sm:$0xff] %vm1163, %v1138
      %1176 = vst.msk [vmem:[#allocation3 + $0x60] sm:$0xff] %vm1163, %v1140
      %1177 = vst.msk [vmem:[#allocation3 + $0x68] sm:$0xff] %vm1163, %v1142
      %1178 = vst.msk [vmem:[#allocation3 + $0x70] sm:$0xff] %vm1163, %v1144
      %1179 = vst.msk [vmem:[#allocation3 + $0x78] sm:$0xff] %vm1163, %v1146
      %v1180 = vld [vmem:[%s985 + $0x2] sm:$0xff]
      %v1181 = vld [vmem:[%s985 + $0xa] sm:$0xff]
      %v1182 = vld [vmem:[%s985 + $0x1a] sm:$0xff]
      %v1183 = vld [vmem:[%s985 + $0x22] sm:$0xff]
      %v1184 = vld [vmem:[%s985 + $0x32] sm:$0xff]
      %v1185 = vld [vmem:[%s985 + $0x3a] sm:$0xff]
      %v1186 = vld [vmem:[%s985 + $0x4a] sm:$0xff]
      %v1187 = vld [vmem:[%s985 + $0x52] sm:$0xff]
      %v1188 = vld [vmem:[%s985 + $0x62] sm:$0xff]
      %v1189 = vld [vmem:[%s985 + $0x6a] sm:$0xff]
      %v1190 = vld [vmem:[%s985 + $0x7a] sm:$0xff]
      %v1191 = vld [vmem:[%s985 + $0x82] sm:$0xff]
      %v1192 = vld [vmem:[%s985 + $0x92] sm:$0xff]
      %v1193 = vld [vmem:[%s985 + $0x9a] sm:$0xff]
      %v1194 = vld [vmem:[%s985 + $0xaa] sm:$0xff]
      %v1195 = vld [vmem:[%s985 + $0xb2] sm:$0xff]
      %1212 = vrot.lane.b32.xlu0 %v1180, 32
      %v1213 = vpop.permute.xlu0 %1212
      %1214 = vrot.lane.b32.xlu0 %v1181, 32
      %v1215 = vpop.permute.xlu0 %1214
      %1216 = vrot.lane.b32.xlu0 %v1182, 32
      %v1217 = vpop.permute.xlu0 %1216
      %1218 = vrot.lane.b32.xlu0 %v1183, 32
      %v1219 = vpop.permute.xlu0 %1218
      %1220 = vrot.lane.b32.xlu0 %v1184, 32
      %v1221 = vpop.permute.xlu0 %1220
      %1222 = vrot.lane.b32.xlu0 %v1185, 32
      %v1223 = vpop.permute.xlu0 %1222
      %1224 = vrot.lane.b32.xlu0 %v1186, 32
      %v1225 = vpop.permute.xlu0 %1224
      %1226 = vrot.lane.b32.xlu0 %v1187, 32
      %v1227 = vpop.permute.xlu0 %1226
      %1228 = vrot.lane.b32.xlu0 %v1188, 32
      %v1229 = vpop.permute.xlu0 %1228
      %1230 = vrot.lane.b32.xlu0 %v1189, 32
      %v1231 = vpop.permute.xlu0 %1230
      %1232 = vrot.lane.b32.xlu0 %v1190, 32
      %v1233 = vpop.permute.xlu0 %1232
      %1234 = vrot.lane.b32.xlu0 %v1191, 32
      %v1235 = vpop.permute.xlu0 %1234
      %1236 = vrot.lane.b32.xlu0 %v1192, 32
      %v1237 = vpop.permute.xlu0 %1236
      %1238 = vrot.lane.b32.xlu0 %v1193, 32
      %v1239 = vpop.permute.xlu0 %1238
      %1240 = vrot.lane.b32.xlu0 %v1194, 32
      %v1241 = vpop.permute.xlu0 %1240
      %1242 = vrot.lane.b32.xlu0 %v1195, 32
      %v1243 = vpop.permute.xlu0 %1242
      %vm1260 = vcmask 294144
      %1261 = vst.msk [vmem:[#allocation3] sm:$0xff] %vm1260, %v1213
      %1262 = vst.msk [vmem:[#allocation3 + $0x8] sm:$0xff] %vm1260, %v1215
      %1263 = vst.msk [vmem:[#allocation3 + $0x10] sm:$0xff] %vm1260, %v1217
      %1264 = vst.msk [vmem:[#allocation3 + $0x18] sm:$0xff] %vm1260, %v1219
      %1265 = vst.msk [vmem:[#allocation3 + $0x20] sm:$0xff] %vm1260, %v1221
      %1266 = vst.msk [vmem:[#allocation3 + $0x28] sm:$0xff] %vm1260, %v1223
      %1267 = vst.msk [vmem:[#allocation3 + $0x30] sm:$0xff] %vm1260, %v1225
      %1268 = vst.msk [vmem:[#allocation3 + $0x38] sm:$0xff] %vm1260, %v1227
      %1269 = vst.msk [vmem:[#allocation3 + $0x40] sm:$0xff] %vm1260, %v1229
      %1270 = vst.msk [vmem:[#allocation3 + $0x48] sm:$0xff] %vm1260, %v1231
      %1271 = vst.msk [vmem:[#allocation3 + $0x50] sm:$0xff] %vm1260, %v1233
      %1272 = vst.msk [vmem:[#allocation3 + $0x58] sm:$0xff] %vm1260, %v1235
      %1273 = vst.msk [vmem:[#allocation3 + $0x60] sm:$0xff] %vm1260, %v1237
      %1274 = vst.msk [vmem:[#allocation3 + $0x68] sm:$0xff] %vm1260, %v1239
      %1275 = vst.msk [vmem:[#allocation3 + $0x70] sm:$0xff] %vm1260, %v1241
      %1276 = vst.msk [vmem:[#allocation3 + $0x78] sm:$0xff] %vm1260, %v1243
      %v1277 = vld [vmem:[#allocation3] sm:$0xff]
      %v1278 = vld [vmem:[#allocation3 + $0x8] sm:$0xff]
      %v1279 = vld [vmem:[#allocation3 + $0x10] sm:$0xff]
      %v1280 = vld [vmem:[#allocation3 + $0x18] sm:$0xff]
      %v1281 = vld [vmem:[#allocation3 + $0x20] sm:$0xff]
      %v1282 = vld [vmem:[#allocation3 + $0x28] sm:$0xff]
      %v1283 = vld [vmem:[#allocation3 + $0x30] sm:$0xff]
      %v1284 = vld [vmem:[#allocation3 + $0x38] sm:$0xff]
      %v1285 = vld [vmem:[#allocation3 + $0x40] sm:$0xff]
      %v1286 = vld [vmem:[#allocation3 + $0x48] sm:$0xff]
      %v1287 = vld [vmem:[#allocation3 + $0x50] sm:$0xff]
      %v1288 = vld [vmem:[#allocation3 + $0x58] sm:$0xff]
      %v1289 = vld [vmem:[#allocation3 + $0x60] sm:$0xff]
      %v1290 = vld [vmem:[#allocation3 + $0x68] sm:$0xff]
      %v1291 = vld [vmem:[#allocation3 + $0x70] sm:$0xff]
      %v1292 = vld [vmem:[#allocation3 + $0x78] sm:$0xff]
      %v1293 = vld [vmem:[%s385] sm:$0xff]
      %v1294 = vld [vmem:[%s385 + $0x8] sm:$0xff]
      %v1295 = vld [vmem:[%s385 + $0x10] sm:$0xff]
      %v1296 = vld [vmem:[%s385 + $0x18] sm:$0xff]
      %v1297 = vld [vmem:[%s385 + $0x20] sm:$0xf]
      %vm1298 = vcmask 293888
      %v1300 = vsel %vm1298, %v1277, 0
      %v1303 = vsel %vm1298, %v1278, 0
      %v1306 = vsel %vm1298, %v1279, 0
      %v1309 = vsel %vm1298, %v1280, 0
      %v1312 = vsel %vm1298, %v1281, 0
      %v1315 = vsel %vm1298, %v1282, 0
      %v1318 = vsel %vm1298, %v1283, 0
      %v1321 = vsel %vm1298, %v1284, 0
      %v1324 = vsel %vm1298, %v1285, 0
      %v1327 = vsel %vm1298, %v1286, 0
      %v1330 = vsel %vm1298, %v1287, 0
      %v1333 = vsel %vm1298, %v1288, 0
      %v1336 = vsel %vm1298, %v1289, 0
      %v1339 = vsel %vm1298, %v1290, 0
      %v1342 = vsel %vm1298, %v1291, 0
      %v1345 = vsel %vm1298, %v1292, 0
      %vm1347 = vcmask 1043456
      %v1349 = vsel %vm1347, %v1297, 0
      %1351 = vmatprep.subr.mxu0 0.0
      %1352 = vmatpush1.msra.mxu0 %v1293
      %1353 = vmatprep.subr.mxu0 0.0
      %1354 = vmatpush1.msra.mxu0 %v1294
      %1355 = vmatprep.subr.mxu0 0.0
      %1356 = vmatpush1.msra.mxu0 %v1295
      %1357 = vmatprep.subr.mxu0 0.0
      %1358 = vmatpush1.msra.mxu0 %v1296
      %1359 = vmatprep.subr.mxu0 0.0
      %1360 = vmatpush1.msra.mxu0 %v1349
      %1361 = vmatprep.subr.mxu0 0.0
      %1362 = vmatpush1.msra.mxu0 0.0
      %1363 = vmatprep.subr.mxu0 0.0
      %1364 = vmatpush1.msra.mxu0 0.0
      %1365 = vmatprep.subr.mxu0 0.0
      %1366 = vmatpush1.msra.mxu0 0.0
      %1367 = vmatprep.subr.mxu0 0.0
      %1368 = vmatpush1.msra.mxu0 0.0
      %1369 = vmatprep.subr.mxu0 0.0
      %1370 = vmatpush1.msra.mxu0 0.0
      %1371 = vmatprep.subr.mxu0 0.0
      %1372 = vmatpush1.msra.mxu0 0.0
      %1373 = vmatprep.subr.mxu0 0.0
      %1374 = vmatpush1.msra.mxu0 0.0
      %1375 = vmatprep.subr.mxu0 0.0
      %1376 = vmatpush1.msra.mxu0 0.0
      %1377 = vmatprep.subr.mxu0 0.0
      %1378 = vmatpush1.msra.mxu0 0.0
      %1379 = vmatprep.subr.mxu0 0.0
      %1380 = vmatpush1.msra.mxu0 0.0
      %1381 = vmatprep.subr.mxu0 0.0
      %1382 = vmatpush1.msra.mxu0 0.0
      %1383 = vmatprep.subr.mxu0 0.0
      %1384 = vmatpush1.msra.mxu0 0.0
      %1385 = vmatprep.subr.mxu0 0.0
      %1386 = vmatpush1.msra.mxu0 0.0
      %1387 = vmatprep.subr.mxu0 0.0
      %1388 = vmatpush1.msra.mxu0 0.0
      %1389 = vmatprep.subr.mxu0 0.0
      %1390 = vmatpush1.msra.mxu0 0.0
      %1391 = vmatprep.subr.mxu0 0.0
      %1392 = vmatpush1.msra.mxu0 0.0
      %1393 = vmatprep.subr.mxu0 0.0
      %1394 = vmatpush1.msra.mxu0 0.0
      %1395 = vmatprep.subr.mxu0 0.0
      %1396 = vmatpush1.msra.mxu0 0.0
      %1397 = vmatprep.subr.mxu0 0.0
      %1398 = vmatpush1.msra.mxu0 0.0
      %1399 = vmatprep.subr.mxu0 0.0
      %1400 = vmatpush1.msra.mxu0 0.0
      %1401 = vmatprep.subr.mxu0 0.0
      %1402 = vmatpush1.msra.mxu0 0.0
      %1403 = vmatprep.subr.mxu0 0.0
      %1404 = vmatpush1.msra.mxu0 0.0
      %1405 = vmatprep.subr.mxu0 0.0
      %1406 = vmatpush1.msra.mxu0 0.0
      %1407 = vmatprep.subr.mxu0 0.0
      %1408 = vmatpush1.msra.mxu0 0.0
      %1409 = vmatprep.subr.mxu0 0.0
      %1410 = vmatpush1.msra.mxu0 0.0
      %1411 = vmatprep.subr.mxu0 0.0
      %1412 = vmatpush1.msra.mxu0 0.0
      %1413 = vmatprep.subr.mxu0 0.0
      %1414 = vmatpush1.msra.mxu0 0.0
      %1415 = vmatprep.mubr.f32.mxu0 0.0
      %1416 = vmatmul.mubr.f32.gmra.mrb[0].mxu0 %v1300
      %v1417 = vpop.f32.mrb[0].mxu0
      %v1418 = vadd.f32 0.0, %v1417
      %v1419 = vpop.f32.mrb[0].mxu0
      %1420 = vmatprep.mubr.f32.mxu0 0.0
      %1421 = vmatmul.mubr.f32.gmra.mrb[0].mxu0 %v1303
      %v1422 = vpop.f32.mrb[0].mxu0
      %v1423 = vadd.f32 0.0, %v1422
      %v1424 = vpop.f32.mrb[0].mxu0
      %1425 = vmatprep.mubr.f32.mxu0 0.0
      %1426 = vmatmul.mubr.f32.gmra.mrb[0].mxu0 %v1306
      %v1427 = vpop.f32.mrb[0].mxu0
      %v1428 = vadd.f32 0.0, %v1427
      %v1429 = vpop.f32.mrb[0].mxu0
      %1430 = vmatprep.mubr.f32.mxu0 0.0
      %1431 = vmatmul.mubr.f32.gmra.mrb[0].mxu0 %v1309
      %v1432 = vpop.f32.mrb[0].mxu0
      %v1433 = vadd.f32 0.0, %v1432
      %v1434 = vpop.f32.mrb[0].mxu0
      %1435 = vmatprep.mubr.f32.mxu0 0.0
      %1436 = vmatmul.mubr.f32.gmra.mrb[0].mxu0 %v1312
      %v1437 = vpop.f32.mrb[0].mxu0
      %v1438 = vadd.f32 0.0, %v1437
      %v1439 = vpop.f32.mrb[0].mxu0
      %1440 = vmatprep.mubr.f32.mxu0 0.0
      %1441 = vmatmul.mubr.f32.gmra.mrb[0].mxu0 %v1315
      %v1442 = vpop.f32.mrb[0].mxu0
      %v1443 = vadd.f32 0.0, %v1442
      %v1444 = vpop.f32.mrb[0].mxu0
      %1445 = vmatprep.mubr.f32.mxu0 0.0
      %1446 = vmatmul.mubr.f32.gmra.mrb[0].mxu0 %v1318
      %v1447 = vpop.f32.mrb[0].mxu0
      %v1448 = vadd.f32 0.0, %v1447
      %v1449 = vpop.f32.mrb[0].mxu0
      %1450 = vmatprep.mubr.f32.mxu0 0.0
      %1451 = vmatmul.mubr.f32.gmra.mrb[0].mxu0 %v1321
      %v1452 = vpop.f32.mrb[0].mxu0
      %v1453 = vadd.f32 0.0, %v1452
      %v1454 = vpop.f32.mrb[0].mxu0
      %1455 = vmatprep.mubr.f32.mxu0 0.0
      %1456 = vmatmul.mubr.f32.gmra.mrb[0].mxu0 %v1324
      %v1457 = vpop.f32.mrb[0].mxu0
      %v1458 = vadd.f32 0.0, %v1457
      %v1459 = vpop.f32.mrb[0].mxu0
      %1460 = vmatprep.mubr.f32.mxu0 0.0
      %1461 = vmatmul.mubr.f32.gmra.mrb[0].mxu0 %v1327
      %v1462 = vpop.f32.mrb[0].mxu0
      %v1463 = vadd.f32 0.0, %v1462
      %v1464 = vpop.f32.mrb[0].mxu0
      %1465 = vmatprep.mubr.f32.mxu0 0.0
      %1466 = vmatmul.mubr.f32.gmra.mrb[0].mxu0 %v1330
      %v1467 = vpop.f32.mrb[0].mxu0
      %v1468 = vadd.f32 0.0, %v1467
      %v1469 = vpop.f32.mrb[0].mxu0
      %1470 = vmatprep.mubr.f32.mxu0 0.0
      %1471 = vmatmul.mubr.f32.gmra.mrb[0].mxu0 %v1333
      %v1472 = vpop.f32.mrb[0].mxu0
      %v1473 = vadd.f32 0.0, %v1472
      %v1474 = vpop.f32.mrb[0].mxu0
      %1475 = vmatprep.mubr.f32.mxu0 0.0
      %1476 = vmatmul.mubr.f32.gmra.mrb[0].mxu0 %v1336
      %v1477 = vpop.f32.mrb[0].mxu0
      %v1478 = vadd.f32 0.0, %v1477
      %v1479 = vpop.f32.mrb[0].mxu0
      %1480 = vmatprep.mubr.f32.mxu0 0.0
      %1481 = vmatmul.mubr.f32.gmra.mrb[0].mxu0 %v1339
      %v1482 = vpop.f32.mrb[0].mxu0
      %v1483 = vadd.f32 0.0, %v1482
      %v1484 = vpop.f32.mrb[0].mxu0
      %1485 = vmatprep.mubr.f32.mxu0 0.0
      %1486 = vmatmul.mubr.f32.gmra.mrb[0].mxu0 %v1342
      %v1487 = vpop.f32.mrb[0].mxu0
      %v1488 = vadd.f32 0.0, %v1487
      %v1489 = vpop.f32.mrb[0].mxu0
      %1490 = vmatprep.mubr.f32.mxu0 0.0
      %1491 = vmatmul.mubr.f32.gmra.mrb[0].mxu0 %v1345
      %v1492 = vpop.f32.mrb[0].mxu0
      %v1493 = vadd.f32 0.0, %v1492
      %v1494 = vpop.f32.mrb[0].mxu0
      %1495 = vdwg.mxu0
      %v1496 = vld [vmem:[%s388] sm:$0x1]
      %v1498 = vlaneseq
      %v1499 = vshrl.u32 %v1498, 7
      %v1500 = vsub.s32 0, %v1499
      %v1501 = vrot.slane %v1496, %v1500
      %v1503 = vmul.f32 %v1418, %v1501
      %v1504 = vmul.f32 %v1423, %v1501
      %v1505 = vmul.f32 %v1428, %v1501
      %v1506 = vmul.f32 %v1433, %v1501
      %v1507 = vmul.f32 %v1438, %v1501
      %v1508 = vmul.f32 %v1443, %v1501
      %v1509 = vmul.f32 %v1448, %v1501
      %v1510 = vmul.f32 %v1453, %v1501
      %v1511 = vmul.f32 %v1458, %v1501
      %v1512 = vmul.f32 %v1463, %v1501
      %v1513 = vmul.f32 %v1468, %v1501
      %v1514 = vmul.f32 %v1473, %v1501
      %v1515 = vmul.f32 %v1478, %v1501
      %v1516 = vmul.f32 %v1483, %v1501
      %v1517 = vmul.f32 %v1488, %v1501
      %v1518 = vmul.f32 %v1493, %v1501
      %v1519 = vld [vmem:[%s391] sm:$0x1]
      %v1521 = vlaneseq
      %v1522 = vshrl.u32 %v1521, 7
      %v1523 = vsub.s32 0, %v1522
      %v1524 = vrot.slane %v1519, %v1523
      %v1526 = vadd.f32 %v1503, %v1524
      %v1527 = vadd.f32 %v1504, %v1524
      %v1528 = vadd.f32 %v1505, %v1524
      %v1529 = vadd.f32 %v1506, %v1524
      %v1530 = vadd.f32 %v1507, %v1524
      %v1531 = vadd.f32 %v1508, %v1524
      %v1532 = vadd.f32 %v1509, %v1524
      %v1533 = vadd.f32 %v1510, %v1524
      %v1534 = vadd.f32 %v1511, %v1524
      %v1535 = vadd.f32 %v1512, %v1524
      %v1536 = vadd.f32 %v1513, %v1524
      %v1537 = vadd.f32 %v1514, %v1524
      %v1538 = vadd.f32 %v1515, %v1524
      %v1539 = vadd.f32 %v1516, %v1524
      %v1540 = vadd.f32 %v1517, %v1524
      %v1541 = vadd.f32 %v1518, %v1524
      %v1542 = vsub.f32 0.0, %v1526
      %v1543 = vsub.f32 0.0, %v1527
      %v1544 = vsub.f32 0.0, %v1528
      %v1545 = vsub.f32 0.0, %v1529
      %v1546 = vsub.f32 0.0, %v1530
      %v1547 = vsub.f32 0.0, %v1531
      %v1548 = vsub.f32 0.0, %v1532
      %v1549 = vsub.f32 0.0, %v1533
      %v1550 = vsub.f32 0.0, %v1534
      %v1551 = vsub.f32 0.0, %v1535
      %v1552 = vsub.f32 0.0, %v1536
      %v1553 = vsub.f32 0.0, %v1537
      %v1554 = vsub.f32 0.0, %v1538
      %v1555 = vsub.f32 0.0, %v1539
      %v1556 = vsub.f32 0.0, %v1540
      %v1557 = vsub.f32 0.0, %v1541
      %v1558 = vmul.f32 %v1542, 1.442695
      %v1559 = vpow.pop %v1558
      %v1560 = vmul.f32 %v1543, 1.442695
      %v1561 = vpow.pop %v1560
      %v1562 = vmul.f32 %v1544, 1.442695
      %v1563 = vpow.pop %v1562
      %v1564 = vmul.f32 %v1545, 1.442695
      %v1565 = vpow.pop %v1564
      %v1566 = vmul.f32 %v1546, 1.442695
      %v1567 = vpow.pop %v1566
      %v1568 = vmul.f32 %v1547, 1.442695
      %v1569 = vpow.pop %v1568
      %v1570 = vmul.f32 %v1548, 1.442695
      %v1571 = vpow.pop %v1570
      %v1572 = vmul.f32 %v1549, 1.442695
      %v1573 = vpow.pop %v1572
      %v1574 = vmul.f32 %v1550, 1.442695
      %v1575 = vpow.pop %v1574
      %v1576 = vmul.f32 %v1551, 1.442695
      %v1577 = vpow.pop %v1576
      %v1578 = vmul.f32 %v1552, 1.442695
      %v1579 = vpow.pop %v1578
      %v1580 = vmul.f32 %v1553, 1.442695
      %v1581 = vpow.pop %v1580
      %v1582 = vmul.f32 %v1554, 1.442695
      %v1583 = vpow.pop %v1582
      %v1584 = vmul.f32 %v1555, 1.442695
      %v1585 = vpow.pop %v1584
      %v1586 = vmul.f32 %v1556, 1.442695
      %v1587 = vpow.pop %v1586
      %v1588 = vmul.f32 %v1557, 1.442695
      %v1589 = vpow.pop %v1588
      %v1590 = vadd.f32 %v1559, 1.0
      %v1591 = vadd.f32 %v1561, 1.0
      %v1592 = vadd.f32 %v1563, 1.0
      %v1593 = vadd.f32 %v1565, 1.0
      %v1594 = vadd.f32 %v1567, 1.0
      %v1595 = vadd.f32 %v1569, 1.0
      %v1596 = vadd.f32 %v1571, 1.0
      %v1597 = vadd.f32 %v1573, 1.0
      %v1598 = vadd.f32 %v1575, 1.0
      %v1599 = vadd.f32 %v1577, 1.0
      %v1600 = vadd.f32 %v1579, 1.0
      %v1601 = vadd.f32 %v1581, 1.0
      %v1602 = vadd.f32 %v1583, 1.0
      %v1603 = vadd.f32 %v1585, 1.0
      %v1604 = vadd.f32 %v1587, 1.0
      %v1605 = vadd.f32 %v1589, 1.0
      %v1606 = vrcp.pop %v1590
      %v1607 = vrcp.pop %v1591
      %v1608 = vrcp.pop %v1592
      %v1609 = vrcp.pop %v1593
      %v1610 = vrcp.pop %v1594
      %v1611 = vrcp.pop %v1595
      %v1612 = vrcp.pop %v1596
      %v1613 = vrcp.pop %v1597
      %v1614 = vrcp.pop %v1598
      %v1615 = vrcp.pop %v1599
      %v1616 = vrcp.pop %v1600
      %v1617 = vrcp.pop %v1601
      %v1618 = vrcp.pop %v1602
      %v1619 = vrcp.pop %v1603
      %v1620 = vrcp.pop %v1604
      %v1621 = vrcp.pop %v1605
      %v1622 = vmul.f32 %v1590, %v1606
      %v1623 = vmul.f32 %v1591, %v1607
      %v1624 = vmul.f32 %v1592, %v1608
      %v1625 = vmul.f32 %v1593, %v1609
      %v1626 = vmul.f32 %v1594, %v1610
      %v1627 = vmul.f32 %v1595, %v1611
      %v1628 = vmul.f32 %v1596, %v1612
      %v1629 = vmul.f32 %v1597, %v1613
      %v1630 = vmul.f32 %v1598, %v1614
      %v1631 = vmul.f32 %v1599, %v1615
      %v1632 = vmul.f32 %v1600, %v1616
      %v1633 = vmul.f32 %v1601, %v1617
      %v1634 = vmul.f32 %v1602, %v1618
      %v1635 = vmul.f32 %v1603, %v1619
      %v1636 = vmul.f32 %v1604, %v1620
      %v1637 = vmul.f32 %v1605, %v1621
      %v1638 = vsub.f32 2.0, %v1622
      %v1639 = vsub.f32 2.0, %v1623
      %v1640 = vsub.f32 2.0, %v1624
      %v1641 = vsub.f32 2.0, %v1625
      %v1642 = vsub.f32 2.0, %v1626
      %v1643 = vsub.f32 2.0, %v1627
      %v1644 = vsub.f32 2.0, %v1628
      %v1645 = vsub.f32 2.0, %v1629
      %v1646 = vsub.f32 2.0, %v1630
      %v1647 = vsub.f32 2.0, %v1631
      %v1648 = vsub.f32 2.0, %v1632
      %v1649 = vsub.f32 2.0, %v1633
      %v1650 = vsub.f32 2.0, %v1634
      %v1651 = vsub.f32 2.0, %v1635
      %v1652 = vsub.f32 2.0, %v1636
      %v1653 = vsub.f32 2.0, %v1637
      %v1654 = vmul.f32 %v1606, %v1638
      %v1655 = vmul.f32 %v1607, %v1639
      %v1656 = vmul.f32 %v1608, %v1640
      %v1657 = vmul.f32 %v1609, %v1641
      %v1658 = vmul.f32 %v1610, %v1642
      %v1659 = vmul.f32 %v1611, %v1643
      %v1660 = vmul.f32 %v1612, %v1644
      %v1661 = vmul.f32 %v1613, %v1645
      %v1662 = vmul.f32 %v1614, %v1646
      %v1663 = vmul.f32 %v1615, %v1647
      %v1664 = vmul.f32 %v1616, %v1648
      %v1665 = vmul.f32 %v1617, %v1649
      %v1666 = vmul.f32 %v1618, %v1650
      %v1667 = vmul.f32 %v1619, %v1651
      %v1668 = vmul.f32 %v1620, %v1652
      %v1669 = vmul.f32 %v1621, %v1653
      %v1670 = vmul.f32 %v1526, %v1654
      %v1671 = vmul.f32 %v1527, %v1655
      %v1672 = vmul.f32 %v1528, %v1656
      %v1673 = vmul.f32 %v1529, %v1657
      %v1674 = vmul.f32 %v1530, %v1658
      %v1675 = vmul.f32 %v1531, %v1659
      %v1676 = vmul.f32 %v1532, %v1660
      %v1677 = vmul.f32 %v1533, %v1661
      %v1678 = vmul.f32 %v1534, %v1662
      %v1679 = vmul.f32 %v1535, %v1663
      %v1680 = vmul.f32 %v1536, %v1664
      %v1681 = vmul.f32 %v1537, %v1665
      %v1682 = vmul.f32 %v1538, %v1666
      %v1683 = vmul.f32 %v1539, %v1667
      %v1684 = vmul.f32 %v1540, %v1668
      %v1685 = vmul.f32 %v1541, %v1669
      %1686 = vst [vmem:[%s403] sm:$0xff] %v1670
      %1687 = vst [vmem:[%s403 + $0x8] sm:$0xff] %v1671
      %1688 = vst [vmem:[%s403 + $0x10] sm:$0xff] %v1672
      %1689 = vst [vmem:[%s403 + $0x18] sm:$0xff] %v1673
      %1690 = vst [vmem:[%s403 + $0x20] sm:$0xff] %v1674
      %1691 = vst [vmem:[%s403 + $0x28] sm:$0xff] %v1675
      %1692 = vst [vmem:[%s403 + $0x30] sm:$0xff] %v1676
      %1693 = vst [vmem:[%s403 + $0x38] sm:$0xff] %v1677
      %1694 = vst [vmem:[%s403 + $0x40] sm:$0xff] %v1678
      %1695 = vst [vmem:[%s403 + $0x48] sm:$0xff] %v1679
      %1696 = vst [vmem:[%s403 + $0x50] sm:$0xff] %v1680
      %1697 = vst [vmem:[%s403 + $0x58] sm:$0xff] %v1681
      %1698 = vst [vmem:[%s403 + $0x60] sm:$0xff] %v1682
      %1699 = vst [vmem:[%s403 + $0x68] sm:$0xff] %v1683
      %1700 = vst [vmem:[%s403 + $0x70] sm:$0xff] %v1684
      %1701 = vst [vmem:[%s403 + $0x78] sm:$0xff] %v1685
      %p1702 = scmp.lt.s32.totalorder %s22, 1
      %s1703 = scalar_select %p1702, %s22, 1
      %p1704 = scmp.lt.s32.totalorder %s23, 1
      %s1705 = scalar_select %p1704, %s23, 1
      %p1706 = scmp.lt.s32.totalorder %s21, 0
      %s1707 = scalar_select %p1706, %s21, 0
      %s1708 = smul.addr %s1705, 16
      %s1709 = sadd.s32 %s1707, %s1708
      %s1710 = smul.addr %s1703, 32
      %s1711 = sadd.s32 %s1709, %s1710
      %s1712 = smul.addr %s1711, 8
      %s1713 = scalar_lea.vmem %s5, %s1712
      // Predicated region
      $region41: #{conv_bn_silu.1} parent=39 // pred_check
        %p1714 = pneg %p195
      $region42: #{conv_bn_silu.1} parent=39 // pred_check_branch
        %1716 = sbr.rel (%p1714) target = $region44
      $region43: #{conv_bn_silu.1} parent=39 // pred_region
        _
      $region44: #{conv_bn_silu.1} parent=39 // pred_fallthru
        _
    $region40: #{conv_bn_silu.1} parent=5 // pred_fallthru
      _
    %p1717 = scmp.le.s32.totalorder 2, %s11
    // Predicated region
    $region45: #{conv_bn_silu.1} parent=5 // pred_check
      %p1718 = pneg %p1717
    $region46: #{conv_bn_silu.1} parent=5 // pred_check_branch
      %1720 = sbr.rel (%p1718) target = $region48
    $region47: #{conv_bn_silu.1} parent=5 // pred_region
      %s1721 = ssub.s32 %s11, 2
      // Predicated region
      $region49: #{conv_bn_silu.1} parent=47 // pred_check
        %p1722 = pneg %p201
      $region50: #{conv_bn_silu.1} parent=47 // pred_check_branch
        %1724 = sbr.rel (%p1722) target = $region52
      $region51: #{conv_bn_silu.1} parent=47 // pred_region
        %p1725 = scmp.lt.s32.totalorder %s25, 1
        %s1726 = scalar_select %p1725, %s25, 1
        %p1727 = scmp.lt.s32.totalorder %s26, 1
        %s1728 = scalar_select %p1727, %s26, 1
        %p1729 = scmp.lt.s32.totalorder %s24, 0
        %s1730 = scalar_select %p1729, %s24, 0
        %s1731 = smul.addr %s1728, 16
        %s1732 = sadd.s32 %s1730, %s1731
        %s1733 = smul.addr %s1726, 32
        %s1734 = sadd.s32 %s1732, %s1733
        %s1735 = smul.addr %s1734, 8
        %s1736 = scalar_lea.vmem %s5, %s1735
      $region52: #{conv_bn_silu.1} parent=47 // pred_fallthru
        _
    $region48: #{conv_bn_silu.1} parent=5 // pred_fallthru
      _
  $region6: #{conv_bn_silu.1} parent=0 // loop_footer
    %s15 = sadd.s32 1, %s11
  $region7: #{conv_bn_silu.1} parent=0 // loop_footer_branch
    %10 = sbr.rel target = $region3
  $region8: #{conv_bn_silu.1} parent=0 // loop_exit
    _

</llo_original>
